<compile_context>
chip_gen: v7x
topology: tpu7x:2x2x1
jax: 0.10.0
libtpu: 0.0.40
codegen_flags: <defaults>
</compile_context>

<pallas_src>
import numpy as np
import jax
import jax.numpy as jnp
from jax.experimental import pallas as pl
from jax.experimental.pallas import tpu as pltpu


# --------------------------------------------------------------------------- #
# In-kernel helpers
# --------------------------------------------------------------------------- #
def _gelu_erf(x):
    """Exact (erf-based) GELU, matching torch.nn.functional.gelu default.

    TODO(synk): lax.erf has no guaranteed Mosaic lowering, so erf is evaluated
    with the Abramowitz & Stegun 7.1.26 polynomial (|abs err| <= 1.5e-7); only
    mul/add/exp/div/select are emitted (VPU + EUP slots).
    """
    u = x * 0.7071067811865476          # x / sqrt(2)
    a1, a2, a3, a4, a5 = 0.254829592, -0.284496736, 1.421413741, -1.453152027, 1.061405429
    p = 0.3275911
    au = jnp.abs(u)
    t = 1.0 / (1.0 + p * au)
    poly = ((((a5 * t + a4) * t + a3) * t + a2) * t + a1) * t
    erf_abs = 1.0 - poly * jnp.exp(-au * au)
    erf_u = jnp.where(u >= 0.0, erf_abs, -erf_abs)
    return 0.5 * x * (1.0 + erf_u)


# --------------------------------------------------------------------------- #
# Host-side 0/1 spatial-mixing matrices (all spatial ops become MXU matmuls)
# --------------------------------------------------------------------------- #
def _conv_shift_mats(B, L):
    """(2, B*L, B*L) block-diag circular shifts: row t <- src (t-1)%L / (t+1)%L."""
    m = np.zeros((2, B * L, B * L), np.float32)
    for b in range(B):
        for t in range(L):
            m[0, b * L + t, b * L + (t - 1) % L] = 1.0
            m[1, b * L + t, b * L + (t + 1) % L] = 1.0
    return m


def _pool_mats(B, L):
    """(3, B*Lh, B*L) selection of MaxPool(3,2,1) window taps 2j-1, 2j, 2j+1.

    Out-of-range taps stay all-zero rows; valid because the pool input is
    post-ReLU (>= 0), so a 0 tap never beats the always-valid center tap.
    """
    Lh = (L + 1) // 2
    m = np.zeros((3, B * Lh, B * L), np.float32)
    for b in range(B):
        for j in range(Lh):
            if 2 * j - 1 >= 0:
                m[0, b * Lh + j, b * L + 2 * j - 1] = 1.0
            m[1, b * Lh + j, b * L + 2 * j] = 1.0
            if 2 * j + 1 < L:
                m[2, b * Lh + j, b * L + 2 * j + 1] = 1.0
    return m


def _proj_gather_mats(B, Lf):
    """(Lf, B, B*Lf): gsel[j] @ g_flat == g3[:, j, :] (per-sample row gather)."""
    m = np.zeros((Lf, B, B * Lf), np.float32)
    for j in range(Lf):
        for b in range(B):
            m[j, b, b * Lf + j] = 1.0
    return m


# --------------------------------------------------------------------------- #
# Fused forward kernel
# --------------------------------------------------------------------------- #
def _make_fused_kernel(B, e_layers, Lf, n_pad):
    def kernel(x_ref, emb_w_ref, emb_b_ref, taps_ref, bn_scale_ref, bn_shift_ref, *rest):
        sp_refs = rest[:2 * e_layers]          # per layer: (shift mats, pool mats)
        gsel_ref = rest[2 * e_layers]          # (Lf, B, B*Lf)
        proj_w_ref = rest[2 * e_layers + 1]    # (Lf, C, n_pad)
        proj_b_ref = rest[2 * e_layers + 2]    # (1, n_pad)
        o_ref = rest[2 * e_layers + 3]         # (B, n_pad)

        # -- enc_embedding_n : Linear(enc_in, d_model), whole batch at once ----
        h = (jnp.dot(x_ref[...], emb_w_ref[...], preferred_element_type=jnp.float32)
             + emb_b_ref[...])                 # (B*S, C)

        # -- e_layers x ConvLayer ----------------------------------------------
        for l in range(e_layers):
            shift_m = sp_refs[2 * l]           # (2, B*L, B*L)
            pool_m = sp_refs[2 * l + 1]        # (3, B*Lh, B*L)
            w0 = taps_ref[3 * l + 0]
            w1 = taps_ref[3 * l + 1]
            w2 = taps_ref[3 * l + 2]
            scale = bn_scale_ref[l]            # (1, C)
            bias = bn_shift_ref[l]             # (1, C)

            # circular Conv1d(k=3, pad=1): y[t] = x[t-1]W0 + x[t]W1 + x[t+1]W2
            hm = jnp.dot(shift_m[0], h, preferred_element_type=jnp.float32)
            hp = jnp.dot(shift_m[1], h, preferred_element_type=jnp.float32)
            y = (jnp.dot(hm, w0, preferred_element_type=jnp.float32)
                 + jnp.dot(h, w1, preferred_element_type=jnp.float32)
                 + jnp.dot(hp, w2, preferred_element_type=jnp.float32))
            # BatchNorm1d(eval) + conv bias folded into per-channel scale/shift, ReLU.
            z = jnp.maximum(y * scale + bias, 0.0)

            # MaxPool1d(kernel=3, stride=2, padding=1) as three tap-selection
            # matmuls + elementwise max (stride-2 downsample folded in).
            p0 = jnp.dot(pool_m[0], z, preferred_element_type=jnp.float32)
            p1 = jnp.dot(pool_m[1], z, preferred_element_type=jnp.float32)
            p2 = jnp.dot(pool_m[2], z, preferred_element_type=jnp.float32)
            h = jnp.maximum(jnp.maximum(p0, p1), p2)       # (B*ceil(L/2), C)

        # -- GELU (exact erf); Dropout is identity in eval -----------------------
        g = _gelu_erf(h)                                   # (B*Lf, C)

        # -- projection: row-major flatten folded into per-row batched matmuls ---
        acc = jnp.zeros((B, n_pad), jnp.float32)
        for j in range(Lf):
            rows = jnp.dot(gsel_ref[j], g, preferred_element_type=jnp.float32)   # (B, C)
            acc = acc + jnp.dot(rows, proj_w_ref[j], preferred_element_type=jnp.float32)
        o_ref[...] = acc + proj_b_ref[...]

    return kernel


# --------------------------------------------------------------------------- #
# Model forward (classification branch)
# --------------------------------------------------------------------------- #
def model_forward(params, x_enc, x_mark_enc=None):
    # x_mark_enc is unused by the classification branch (kept for signature parity).
    B, S, E = x_enc.shape
    e_layers = params["bn_scale"].shape[0]
    Lf, _, n_pad = params["proj_w"].shape
    num_class = params["num_class"]

    # Per-layer input lengths under MaxPool1d(3, 2, 1) (ceil halving).
    Ls, L = [], S
    for _ in range(e_layers):
        Ls.append(L)
        L = (L + 1) // 2
    assert L == Lf, (L, Lf)

    sp = []
    for l in Ls:
        sp.append(jnp.asarray(_conv_shift_mats(B, l)))
        sp.append(jnp.asarray(_pool_mats(B, l)))
    gsel = jnp.asarray(_proj_gather_mats(B, Lf))

    x_flat = x_enc.reshape(B * S, E)
    kernel = _make_fused_kernel(B, e_layers, Lf, n_pad)

    def full(shape):
        n = len(shape)
        return pl.BlockSpec(shape, lambda i, _n=n: (0,) * _n)

    operands = [x_flat, params["emb_w"], params["emb_b"], params["taps"],
                params["bn_scale"], params["bn_shift"], *sp, gsel,
                params["proj_w"], params["proj_b"]]
    in_specs = [full(np.shape(op)) for op in operands]

    out = pl.pallas_call(
        kernel,
        out_shape=jax.ShapeDtypeStruct((B, n_pad), jnp.float32),
        grid=(1,),
        in_specs=in_specs,
        out_specs=full((B, n_pad)),
        compiler_params=pltpu.CompilerParams(dimension_semantics=("arbitrary",)),
    )(*operands)

    return out[:, :num_class]


# --------------------------------------------------------------------------- #
# Pure-JAX reference (same math, no Pallas) for a correctness cross-check
# --------------------------------------------------------------------------- #
def model_forward_ref(params, x_enc):
    B, S, E = x_enc.shape
    e_layers = params["bn_scale"].shape[0]
    Lf, C, n_pad = params["proj_w"].shape
    num_class = params["num_class"]

    h = x_enc @ params["emb_w"] + params["emb_b"]          # (B, S, C)
    for l in range(e_layers):
        L = h.shape[1]
        w0 = params["taps"][3 * l + 0]
        w1 = params["taps"][3 * l + 1]
        w2 = params["taps"][3 * l + 2]
        hm = jnp.roll(h, 1, axis=1)
        hp = jnp.roll(h, -1, axis=1)
        y = hm @ w0 + h @ w1 + hp @ w2
        z = jnp.maximum(y * params["bn_scale"][l] + params["bn_shift"][l], 0.0)
        zp = jnp.pad(z, ((0, 0), (1, 1), (0, 0)), constant_values=-jnp.inf)
        Lh = (L + 1) // 2
        h = jnp.stack([jnp.max(zp[:, 2 * j:2 * j + 3, :], axis=1) for j in range(Lh)], axis=1)
    g = jax.nn.gelu(h, approximate=False)                  # (B, Lf, C)
    out = g.reshape(B, Lf * C) @ params["proj_w"].reshape(Lf * C, n_pad) + params["proj_b"]
    return out[:, :num_class]


# --------------------------------------------------------------------------- #
# Parameters (deterministic, synthetic — shapes follow the PyTorch __init__)
# --------------------------------------------------------------------------- #
def init_params(key, cfg):
    enc_in, d_model = cfg["enc_in"], cfg["d_model"]
    e_layers, num_class, seq_len = cfg["e_layers"], cfg["num_class"], cfg["seq_len"]
    eps = 1e-5
    keys = jax.random.split(key, 4 + 6 * e_layers)
    ki = iter(range(len(keys)))

    params = {}
    # enc_embedding_n: nn.Linear(enc_in, d_model)
    params["emb_w"] = 0.1 * jax.random.normal(keys[next(ki)], (enc_in, d_model), jnp.float32)
    params["emb_b"] = 0.1 * jax.random.normal(keys[next(ki)], (1, d_model), jnp.float32)

    taps, scales, shifts = [], [], []
    for _ in range(e_layers):
        w = 0.1 * jax.random.normal(keys[next(ki)], (d_model, d_model, 3), jnp.float32)  # (Cout, Cin, 3)
        conv_b = 0.1 * jax.random.normal(keys[next(ki)], (d_model,), jnp.float32)
        gamma = jax.random.uniform(keys[next(ki)], (d_model,), jnp.float32, 0.5, 1.5)
        beta = 0.1 * jax.random.normal(keys[next(ki)], (d_model,), jnp.float32)
        run_mean = 0.1 * jax.random.normal(keys[next(ki)], (d_model,), jnp.float32)
        run_var = jax.random.uniform(keys[next(ki)], (d_model,), jnp.float32, 0.5, 1.5)
        scale = gamma / jnp.sqrt(run_var + eps)
        # BN(conv_out + conv_b) = scale*conv_out + (scale*conv_b + beta - mean*scale)
        shift = beta - run_mean * scale + scale * conv_b
        # Conv1d weight (Cout, Cin, 3) -> per-tap (Cin, Cout) matmul operands.
        for k in range(3):
            taps.append(w[:, :, k].T)
        scales.append(scale.reshape(1, d_model))
        shifts.append(shift.reshape(1, d_model))
    params["taps"] = jnp.stack(taps, axis=0)        # (3*e_layers, C, C)
    params["bn_scale"] = jnp.stack(scales, axis=0)  # (e_layers, 1, C)
    params["bn_shift"] = jnp.stack(shifts, axis=0)  # (e_layers, 1, C)

    # projection: nn.Linear(d_model * (seq_len // 2**e_layers + factor), num_class)
    factor = 0 if seq_len % (2 ** e_layers) == 0 else 1
    l_final = seq_len // 2 ** e_layers + factor
    in_features = d_model * l_final
    n_pad = ((num_class + 127) // 128) * 128        # lane-dense output padding
    proj_w = 0.1 * jax.random.normal(keys[next(ki)], (in_features, num_class), jnp.float32)
    proj_b = 0.1 * jax.random.normal(keys[next(ki)], (num_class,), jnp.float32)
    proj_w_pad = jnp.zeros((in_features, n_pad), jnp.float32).at[:, :num_class].set(proj_w)
    params["proj_w"] = proj_w_pad.reshape(l_final, d_model, n_pad)   # (Lf, C, n_pad)
    params["proj_b"] = jnp.zeros((1, n_pad), jnp.float32).at[:, :num_class].set(proj_b)
    params["num_class"] = num_class
    return params


# --------------------------------------------------------------------------- #
if __name__ == "__main__":
    cfg = dict(task_name="classification", seq_len=16, label_len=0, pred_len=0,
               enc_in=4, d_model=32, e_layers=2, num_class=3, dropout=0.1)

    key = jax.random.PRNGKey(0)
    k_x, k_m, k_p = jax.random.split(key, 3)
    x_enc = jax.random.normal(k_x, (2, cfg["seq_len"], cfg["enc_in"]), jnp.float32)
    x_mark_enc = jax.random.normal(k_m, (2, cfg["seq_len"], 4), jnp.float32)  # unused

    params = init_params(k_p, cfg)
    out = model_forward(params, x_enc, x_mark_enc)
    out = jax.block_until_ready(out)

    ref = jax.block_until_ready(model_forward_ref(params, x_enc))

    assert out.shape == (2, cfg["num_class"]), out.shape
    assert jnp.all(jnp.isfinite(out))
    np.testing.assert_allclose(np.asarray(out), np.asarray(ref), rtol=2e-3, atol=2e-3)
    print("KERNEL_OK")
</pallas_src>

<mosaic_0001>
module attributes {stable_mosaic.version = 11 : i64} {
  func.func @kernel(%arg0: i32, %arg1: memref<32x4xf32, #tpu.memory_space<vmem>>, %arg2: memref<4x32xf32, #tpu.memory_space<vmem>>, %arg3: memref<1x32xf32, #tpu.memory_space<vmem>>, %arg4: memref<6x32x32xf32, #tpu.memory_space<vmem>>, %arg5: memref<2x1x32xf32, #tpu.memory_space<vmem>>, %arg6: memref<2x1x32xf32, #tpu.memory_space<vmem>>, %arg7: memref<2x32x32xf32, #tpu.memory_space<vmem>>, %arg8: memref<3x16x32xf32, #tpu.memory_space<vmem>>, %arg9: memref<2x16x16xf32, #tpu.memory_space<vmem>>, %arg10: memref<3x8x16xf32, #tpu.memory_space<vmem>>, %arg11: memref<4x2x8xf32, #tpu.memory_space<vmem>>, %arg12: memref<4x32x128xf32, #tpu.memory_space<vmem>>, %arg13: memref<1x128xf32, #tpu.memory_space<vmem>>, %arg14: memref<2x128xf32, #tpu.memory_space<vmem>>) attributes {dimension_semantics = [#tpu.dimension_semantics<arbitrary>], iteration_bounds = array<i64: 1>, scalar_prefetch = 0 : i64, scratch_operands = 0 : i64, tpu.core_type = #tpu.core_type<tc>, window_params = [{pipeline_mode = #tpu.pipeline_mode<synchronous>, transform_indices = @transform_0, window_bounds = array<i64: 32, 4>}, {pipeline_mode = #tpu.pipeline_mode<synchronous>, transform_indices = @transform_1, window_bounds = array<i64: 4, 32>}, {pipeline_mode = #tpu.pipeline_mode<synchronous>, transform_indices = @transform_2, window_bounds = array<i64: 1, 32>}, {pipeline_mode = #tpu.pipeline_mode<synchronous>, transform_indices = @transform_3, window_bounds = array<i64: 6, 32, 32>}, {pipeline_mode = #tpu.pipeline_mode<synchronous>, transform_indices = @transform_4, window_bounds = array<i64: 2, 1, 32>}, {pipeline_mode = #tpu.pipeline_mode<synchronous>, transform_indices = @transform_5, window_bounds = array<i64: 2, 1, 32>}, {pipeline_mode = #tpu.pipeline_mode<synchronous>, transform_indices = @transform_6, window_bounds = array<i64: 2, 32, 32>}, {pipeline_mode = #tpu.pipeline_mode<synchronous>, transform_indices = @transform_7, window_bounds = array<i64: 3, 16, 32>}, {pipeline_mode = #tpu.pipeline_mode<synchronous>, transform_indices = @transform_8, window_bounds = array<i64: 2, 16, 16>}, {pipeline_mode = #tpu.pipeline_mode<synchronous>, transform_indices = @transform_9, window_bounds = array<i64: 3, 8, 16>}, {pipeline_mode = #tpu.pipeline_mode<synchronous>, transform_indices = @transform_10, window_bounds = array<i64: 4, 2, 8>}, {pipeline_mode = #tpu.pipeline_mode<synchronous>, transform_indices = @transform_11, window_bounds = array<i64: 4, 32, 128>}, {pipeline_mode = #tpu.pipeline_mode<synchronous>, transform_indices = @transform_12, window_bounds = array<i64: 1, 128>}, {pipeline_mode = #tpu.pipeline_mode<synchronous>, transform_indices = @transform_13, window_bounds = array<i64: 2, 128>}]} {
    %c0 = arith.constant 0 : index
    %c0_0 = arith.constant 0 : index
    %0 = vector.load %arg1[%c0, %c0_0] : memref<32x4xf32, #tpu.memory_space<vmem>>, vector<32x4xf32>
    %c0_1 = arith.constant 0 : index
    %c0_2 = arith.constant 0 : index
    %1 = vector.load %arg2[%c0_1, %c0_2] : memref<4x32xf32, #tpu.memory_space<vmem>>, vector<4x32xf32>
    %cst = arith.constant dense<0.000000e+00> : vector<32x32xf32>
    %2 = tpu.matmul %0, %1, %cst {dimension_numbers = #tpu.dot_dimension_numbers<[1], [0], [0], [1], [0, 0, 1, 1], [], []>} : vector<32x4xf32>, vector<4x32xf32>, vector<32x32xf32> -> vector<32x32xf32>
    %c0_3 = arith.constant 0 : index
    %c0_4 = arith.constant 0 : index
    %3 = vector.load %arg3[%c0_3, %c0_4] : memref<1x32xf32, #tpu.memory_space<vmem>>, vector<1x32xf32>
    %4 = vector.broadcast %3 : vector<1x32xf32> to vector<32x32xf32>
    %5 = arith.addf %2, %4 : vector<32x32xf32>
    %c0_5 = arith.constant 0 : index
    %c0_6 = arith.constant 0 : index
    %c0_7 = arith.constant 0 : index
    %6 = vector.load %arg4[%c0_5, %c0_6, %c0_7] : memref<6x32x32xf32, #tpu.memory_space<vmem>>, vector<1x32x32xf32>
    %7 = vector.shape_cast %6 : vector<1x32x32xf32> to vector<32x32xf32>
    %c1 = arith.constant 1 : index
    %c0_8 = arith.constant 0 : index
    %c0_9 = arith.constant 0 : index
    %8 = vector.load %arg4[%c1, %c0_8, %c0_9] : memref<6x32x32xf32, #tpu.memory_space<vmem>>, vector<1x32x32xf32>
    %9 = vector.shape_cast %8 : vector<1x32x32xf32> to vector<32x32xf32>
    %c2 = arith.constant 2 : index
    %c0_10 = arith.constant 0 : index
    %c0_11 = arith.constant 0 : index
    %10 = vector.load %arg4[%c2, %c0_10, %c0_11] : memref<6x32x32xf32, #tpu.memory_space<vmem>>, vector<1x32x32xf32>
    %11 = vector.shape_cast %10 : vector<1x32x32xf32> to vector<32x32xf32>
    %c0_12 = arith.constant 0 : index
    %c0_13 = arith.constant 0 : index
    %c0_14 = arith.constant 0 : index
    %12 = vector.load %arg5[%c0_12, %c0_13, %c0_14] : memref<2x1x32xf32, #tpu.memory_space<vmem>>, vector<1x1x32xf32>
    %13 = vector.shape_cast %12 : vector<1x1x32xf32> to vector<1x32xf32>
    %c0_15 = arith.constant 0 : index
    %c0_16 = arith.constant 0 : index
    %c0_17 = arith.constant 0 : index
    %14 = vector.load %arg6[%c0_15, %c0_16, %c0_17] : memref<2x1x32xf32, #tpu.memory_space<vmem>>, vector<1x1x32xf32>
    %15 = vector.shape_cast %14 : vector<1x1x32xf32> to vector<1x32xf32>
    %c0_18 = arith.constant 0 : index
    %c0_19 = arith.constant 0 : index
    %c0_20 = arith.constant 0 : index
    %16 = vector.load %arg7[%c0_18, %c0_19, %c0_20] : memref<2x32x32xf32, #tpu.memory_space<vmem>>, vector<1x32x32xf32>
    %17 = vector.shape_cast %16 : vector<1x32x32xf32> to vector<32x32xf32>
    %cst_21 = arith.constant dense<0.000000e+00> : vector<32x32xf32>
    %18 = tpu.matmul %17, %5, %cst_21 {dimension_numbers = #tpu.dot_dimension_numbers<[1], [0], [0], [1], [0, 0, 1, 1], [], []>} : vector<32x32xf32>, vector<32x32xf32>, vector<32x32xf32> -> vector<32x32xf32>
    %c1_22 = arith.constant 1 : index
    %c0_23 = arith.constant 0 : index
    %c0_24 = arith.constant 0 : index
    %19 = vector.load %arg7[%c1_22, %c0_23, %c0_24] : memref<2x32x32xf32, #tpu.memory_space<vmem>>, vector<1x32x32xf32>
    %20 = vector.shape_cast %19 : vector<1x32x32xf32> to vector<32x32xf32>
    %cst_25 = arith.constant dense<0.000000e+00> : vector<32x32xf32>
    %21 = tpu.matmul %20, %5, %cst_25 {dimension_numbers = #tpu.dot_dimension_numbers<[1], [0], [0], [1], [0, 0, 1, 1], [], []>} : vector<32x32xf32>, vector<32x32xf32>, vector<32x32xf32> -> vector<32x32xf32>
    %cst_26 = arith.constant dense<0.000000e+00> : vector<32x32xf32>
    %22 = tpu.matmul %18, %7, %cst_26 {dimension_numbers = #tpu.dot_dimension_numbers<[1], [0], [0], [1], [0, 0, 1, 1], [], []>} : vector<32x32xf32>, vector<32x32xf32>, vector<32x32xf32> -> vector<32x32xf32>
    %cst_27 = arith.constant dense<0.000000e+00> : vector<32x32xf32>
    %23 = tpu.matmul %5, %9, %cst_27 {dimension_numbers = #tpu.dot_dimension_numbers<[1], [0], [0], [1], [0, 0, 1, 1], [], []>} : vector<32x32xf32>, vector<32x32xf32>, vector<32x32xf32> -> vector<32x32xf32>
    %24 = arith.addf %22, %23 : vector<32x32xf32>
    %cst_28 = arith.constant dense<0.000000e+00> : vector<32x32xf32>
    %25 = tpu.matmul %21, %11, %cst_28 {dimension_numbers = #tpu.dot_dimension_numbers<[1], [0], [0], [1], [0, 0, 1, 1], [], []>} : vector<32x32xf32>, vector<32x32xf32>, vector<32x32xf32> -> vector<32x32xf32>
    %26 = arith.addf %24, %25 : vector<32x32xf32>
    %27 = vector.broadcast %13 : vector<1x32xf32> to vector<32x32xf32>
    %28 = arith.mulf %26, %27 : vector<32x32xf32>
    %29 = vector.broadcast %15 : vector<1x32xf32> to vector<32x32xf32>
    %30 = arith.addf %28, %29 : vector<32x32xf32>
    %cst_29 = arith.constant 0.000000e+00 : f32
    %31 = vector.broadcast %cst_29 : f32 to vector<32x32xf32>
    %32 = arith.maximumf %30, %31 : vector<32x32xf32>
    %c0_30 = arith.constant 0 : index
    %c0_31 = arith.constant 0 : index
    %c0_32 = arith.constant 0 : index
    %33 = vector.load %arg8[%c0_30, %c0_31, %c0_32] : memref<3x16x32xf32, #tpu.memory_space<vmem>>, vector<1x16x32xf32>
    %34 = vector.shape_cast %33 : vector<1x16x32xf32> to vector<16x32xf32>
    %cst_33 = arith.constant dense<0.000000e+00> : vector<16x32xf32>
    %35 = tpu.matmul %34, %32, %cst_33 {dimension_numbers = #tpu.dot_dimension_numbers<[1], [0], [0], [1], [0, 0, 1, 1], [], []>} : vector<16x32xf32>, vector<32x32xf32>, vector<16x32xf32> -> vector<16x32xf32>
    %c1_34 = arith.constant 1 : index
    %c0_35 = arith.constant 0 : index
    %c0_36 = arith.constant 0 : index
    %36 = vector.load %arg8[%c1_34, %c0_35, %c0_36] : memref<3x16x32xf32, #tpu.memory_space<vmem>>, vector<1x16x32xf32>
    %37 = vector.shape_cast %36 : vector<1x16x32xf32> to vector<16x32xf32>
    %cst_37 = arith.constant dense<0.000000e+00> : vector<16x32xf32>
    %38 = tpu.matmul %37, %32, %cst_37 {dimension_numbers = #tpu.dot_dimension_numbers<[1], [0], [0], [1], [0, 0, 1, 1], [], []>} : vector<16x32xf32>, vector<32x32xf32>, vector<16x32xf32> -> vector<16x32xf32>
    %c2_38 = arith.constant 2 : index
    %c0_39 = arith.constant 0 : index
    %c0_40 = arith.constant 0 : index
    %39 = vector.load %arg8[%c2_38, %c0_39, %c0_40] : memref<3x16x32xf32, #tpu.memory_space<vmem>>, vector<1x16x32xf32>
    %40 = vector.shape_cast %39 : vector<1x16x32xf32> to vector<16x32xf32>
    %cst_41 = arith.constant dense<0.000000e+00> : vector<16x32xf32>
    %41 = tpu.matmul %40, %32, %cst_41 {dimension_numbers = #tpu.dot_dimension_numbers<[1], [0], [0], [1], [0, 0, 1, 1], [], []>} : vector<16x32xf32>, vector<32x32xf32>, vector<16x32xf32> -> vector<16x32xf32>
    %42 = arith.maximumf %35, %38 : vector<16x32xf32>
    %43 = arith.maximumf %42, %41 : vector<16x32xf32>
    %c3 = arith.constant 3 : index
    %c0_42 = arith.constant 0 : index
    %c0_43 = arith.constant 0 : index
    %44 = vector.load %arg4[%c3, %c0_42, %c0_43] : memref<6x32x32xf32, #tpu.memory_space<vmem>>, vector<1x32x32xf32>
    %45 = vector.shape_cast %44 : vector<1x32x32xf32> to vector<32x32xf32>
    %c4 = arith.constant 4 : index
    %c0_44 = arith.constant 0 : index
    %c0_45 = arith.constant 0 : index
    %46 = vector.load %arg4[%c4, %c0_44, %c0_45] : memref<6x32x32xf32, #tpu.memory_space<vmem>>, vector<1x32x32xf32>
    %47 = vector.shape_cast %46 : vector<1x32x32xf32> to vector<32x32xf32>
    %c5 = arith.constant 5 : index
    %c0_46 = arith.constant 0 : index
    %c0_47 = arith.constant 0 : index
    %48 = vector.load %arg4[%c5, %c0_46, %c0_47] : memref<6x32x32xf32, #tpu.memory_space<vmem>>, vector<1x32x32xf32>
    %49 = vector.shape_cast %48 : vector<1x32x32xf32> to vector<32x32xf32>
    %c1_48 = arith.constant 1 : index
    %c0_49 = arith.constant 0 : index
    %c0_50 = arith.constant 0 : index
    %50 = vector.load %arg5[%c1_48, %c0_49, %c0_50] : memref<2x1x32xf32, #tpu.memory_space<vmem>>, vector<1x1x32xf32>
    %51 = vector.shape_cast %50 : vector<1x1x32xf32> to vector<1x32xf32>
    %c1_51 = arith.constant 1 : index
    %c0_52 = arith.constant 0 : index
    %c0_53 = arith.constant 0 : index
    %52 = vector.load %arg6[%c1_51, %c0_52, %c0_53] : memref<2x1x32xf32, #tpu.memory_space<vmem>>, vector<1x1x32xf32>
    %53 = vector.shape_cast %52 : vector<1x1x32xf32> to vector<1x32xf32>
    %c0_54 = arith.constant 0 : index
    %c0_55 = arith.constant 0 : index
    %c0_56 = arith.constant 0 : index
    %54 = vector.load %arg9[%c0_54, %c0_55, %c0_56] : memref<2x16x16xf32, #tpu.memory_space<vmem>>, vector<1x16x16xf32>
    %55 = vector.shape_cast %54 : vector<1x16x16xf32> to vector<16x16xf32>
    %cst_57 = arith.constant dense<0.000000e+00> : vector<16x32xf32>
    %56 = tpu.matmul %55, %43, %cst_57 {dimension_numbers = #tpu.dot_dimension_numbers<[1], [0], [0], [1], [0, 0, 1, 1], [], []>} : vector<16x16xf32>, vector<16x32xf32>, vector<16x32xf32> -> vector<16x32xf32>
    %c1_58 = arith.constant 1 : index
    %c0_59 = arith.constant 0 : index
    %c0_60 = arith.constant 0 : index
    %57 = vector.load %arg9[%c1_58, %c0_59, %c0_60] : memref<2x16x16xf32, #tpu.memory_space<vmem>>, vector<1x16x16xf32>
    %58 = vector.shape_cast %57 : vector<1x16x16xf32> to vector<16x16xf32>
    %cst_61 = arith.constant dense<0.000000e+00> : vector<16x32xf32>
    %59 = tpu.matmul %58, %43, %cst_61 {dimension_numbers = #tpu.dot_dimension_numbers<[1], [0], [0], [1], [0, 0, 1, 1], [], []>} : vector<16x16xf32>, vector<16x32xf32>, vector<16x32xf32> -> vector<16x32xf32>
    %cst_62 = arith.constant dense<0.000000e+00> : vector<16x32xf32>
    %60 = tpu.matmul %56, %45, %cst_62 {dimension_numbers = #tpu.dot_dimension_numbers<[1], [0], [0], [1], [0, 0, 1, 1], [], []>} : vector<16x32xf32>, vector<32x32xf32>, vector<16x32xf32> -> vector<16x32xf32>
    %cst_63 = arith.constant dense<0.000000e+00> : vector<16x32xf32>
    %61 = tpu.matmul %43, %47, %cst_63 {dimension_numbers = #tpu.dot_dimension_numbers<[1], [0], [0], [1], [0, 0, 1, 1], [], []>} : vector<16x32xf32>, vector<32x32xf32>, vector<16x32xf32> -> vector<16x32xf32>
    %62 = arith.addf %60, %61 : vector<16x32xf32>
    %cst_64 = arith.constant dense<0.000000e+00> : vector<16x32xf32>
    %63 = tpu.matmul %59, %49, %cst_64 {dimension_numbers = #tpu.dot_dimension_numbers<[1], [0], [0], [1], [0, 0, 1, 1], [], []>} : vector<16x32xf32>, vector<32x32xf32>, vector<16x32xf32> -> vector<16x32xf32>
    %64 = arith.addf %62, %63 : vector<16x32xf32>
    %65 = vector.broadcast %51 : vector<1x32xf32> to vector<16x32xf32>
    %66 = arith.mulf %64, %65 : vector<16x32xf32>
    %67 = vector.broadcast %53 : vector<1x32xf32> to vector<16x32xf32>
    %68 = arith.addf %66, %67 : vector<16x32xf32>
    %cst_65 = arith.constant 0.000000e+00 : f32
    %69 = vector.broadcast %cst_65 : f32 to vector<16x32xf32>
    %70 = arith.maximumf %68, %69 : vector<16x32xf32>
    %c0_66 = arith.constant 0 : index
    %c0_67 = arith.constant 0 : index
    %c0_68 = arith.constant 0 : index
    %71 = vector.load %arg10[%c0_66, %c0_67, %c0_68] : memref<3x8x16xf32, #tpu.memory_space<vmem>>, vector<1x8x16xf32>
    %72 = vector.shape_cast %71 : vector<1x8x16xf32> to vector<8x16xf32>
    %cst_69 = arith.constant dense<0.000000e+00> : vector<8x32xf32>
    %73 = tpu.matmul %72, %70, %cst_69 {dimension_numbers = #tpu.dot_dimension_numbers<[1], [0], [0], [1], [0, 0, 1, 1], [], []>} : vector<8x16xf32>, vector<16x32xf32>, vector<8x32xf32> -> vector<8x32xf32>
    %c1_70 = arith.constant 1 : index
    %c0_71 = arith.constant 0 : index
    %c0_72 = arith.constant 0 : index
    %74 = vector.load %arg10[%c1_70, %c0_71, %c0_72] : memref<3x8x16xf32, #tpu.memory_space<vmem>>, vector<1x8x16xf32>
    %75 = vector.shape_cast %74 : vector<1x8x16xf32> to vector<8x16xf32>
    %cst_73 = arith.constant dense<0.000000e+00> : vector<8x32xf32>
    %76 = tpu.matmul %75, %70, %cst_73 {dimension_numbers = #tpu.dot_dimension_numbers<[1], [0], [0], [1], [0, 0, 1, 1], [], []>} : vector<8x16xf32>, vector<16x32xf32>, vector<8x32xf32> -> vector<8x32xf32>
    %c2_74 = arith.constant 2 : index
    %c0_75 = arith.constant 0 : index
    %c0_76 = arith.constant 0 : index
    %77 = vector.load %arg10[%c2_74, %c0_75, %c0_76] : memref<3x8x16xf32, #tpu.memory_space<vmem>>, vector<1x8x16xf32>
    %78 = vector.shape_cast %77 : vector<1x8x16xf32> to vector<8x16xf32>
    %cst_77 = arith.constant dense<0.000000e+00> : vector<8x32xf32>
    %79 = tpu.matmul %78, %70, %cst_77 {dimension_numbers = #tpu.dot_dimension_numbers<[1], [0], [0], [1], [0, 0, 1, 1], [], []>} : vector<8x16xf32>, vector<16x32xf32>, vector<8x32xf32> -> vector<8x32xf32>
    %80 = arith.maximumf %73, %76 : vector<8x32xf32>
    %81 = arith.maximumf %80, %79 : vector<8x32xf32>
    %cst_78 = arith.constant 0.707106769 : f32
    %82 = vector.broadcast %cst_78 : f32 to vector<8x32xf32>
    %83 = arith.mulf %81, %82 : vector<8x32xf32>
    %84 = math.absf %83 : vector<8x32xf32>
    %cst_79 = arith.constant 0.327591091 : f32
    %85 = vector.broadcast %cst_79 : f32 to vector<8x32xf32>
    %86 = arith.mulf %85, %84 : vector<8x32xf32>
    %cst_80 = arith.constant 1.000000e+00 : f32
    %87 = vector.broadcast %cst_80 : f32 to vector<8x32xf32>
    %88 = arith.addf %87, %86 : vector<8x32xf32>
    %cst_81 = arith.constant 1.000000e+00 : f32
    %89 = vector.broadcast %cst_81 : f32 to vector<8x32xf32>
    %90 = arith.divf %89, %88 : vector<8x32xf32>
    %cst_82 = arith.constant 1.06140542 : f32
    %91 = vector.broadcast %cst_82 : f32 to vector<8x32xf32>
    %92 = arith.mulf %91, %90 : vector<8x32xf32>
    %cst_83 = arith.constant -1.45315206 : f32
    %93 = vector.broadcast %cst_83 : f32 to vector<8x32xf32>
    %94 = arith.addf %92, %93 : vector<8x32xf32>
    %95 = arith.mulf %94, %90 : vector<8x32xf32>
    %cst_84 = arith.constant 1.42141378 : f32
    %96 = vector.broadcast %cst_84 : f32 to vector<8x32xf32>
    %97 = arith.addf %95, %96 : vector<8x32xf32>
    %98 = arith.mulf %97, %90 : vector<8x32xf32>
    %cst_85 = arith.constant -0.284496725 : f32
    %99 = vector.broadcast %cst_85 : f32 to vector<8x32xf32>
    %100 = arith.addf %98, %99 : vector<8x32xf32>
    %101 = arith.mulf %100, %90 : vector<8x32xf32>
    %cst_86 = arith.constant 0.254829586 : f32
    %102 = vector.broadcast %cst_86 : f32 to vector<8x32xf32>
    %103 = arith.addf %101, %102 : vector<8x32xf32>
    %104 = arith.mulf %103, %90 : vector<8x32xf32>
    %cst_87 = arith.constant 0.000000e+00 : f32
    %105 = vector.broadcast %cst_87 : f32 to vector<8x32xf32>
    %106 = arith.subf %105, %84 : vector<8x32xf32>
    %107 = arith.mulf %106, %84 : vector<8x32xf32>
    %108 = math.exp %107 : vector<8x32xf32>
    %109 = arith.mulf %104, %108 : vector<8x32xf32>
    %cst_88 = arith.constant 1.000000e+00 : f32
    %110 = vector.broadcast %cst_88 : f32 to vector<8x32xf32>
    %111 = arith.subf %110, %109 : vector<8x32xf32>
    %cst_89 = arith.constant 0.000000e+00 : f32
    %112 = vector.broadcast %cst_89 : f32 to vector<8x32xf32>
    %113 = arith.cmpf oge, %83, %112 : vector<8x32xf32>
    %cst_90 = arith.constant 0.000000e+00 : f32
    %114 = vector.broadcast %cst_90 : f32 to vector<8x32xf32>
    %115 = arith.subf %114, %111 : vector<8x32xf32>
    %116 = arith.select %113, %111, %115 : vector<8x32xi1>, vector<8x32xf32>
    %cst_91 = arith.constant 5.000000e-01 : f32
    %117 = vector.broadcast %cst_91 : f32 to vector<8x32xf32>
    %118 = arith.mulf %117, %81 : vector<8x32xf32>
    %cst_92 = arith.constant 1.000000e+00 : f32
    %119 = vector.broadcast %cst_92 : f32 to vector<8x32xf32>
    %120 = arith.addf %119, %116 : vector<8x32xf32>
    %121 = arith.mulf %118, %120 : vector<8x32xf32>
    %cst_93 = arith.constant 0.000000e+00 : f32
    %122 = vector.broadcast %cst_93 : f32 to vector<2x128xf32>
    %c0_94 = arith.constant 0 : index
    %c0_95 = arith.constant 0 : index
    %c0_96 = arith.constant 0 : index
    %123 = vector.load %arg11[%c0_94, %c0_95, %c0_96] : memref<4x2x8xf32, #tpu.memory_space<vmem>>, vector<1x2x8xf32>
    %124 = vector.shape_cast %123 : vector<1x2x8xf32> to vector<2x8xf32>
    %cst_97 = arith.constant dense<0.000000e+00> : vector<2x32xf32>
    %125 = tpu.matmul %124, %121, %cst_97 {dimension_numbers = #tpu.dot_dimension_numbers<[1], [0], [0], [1], [0, 0, 1, 1], [], []>} : vector<2x8xf32>, vector<8x32xf32>, vector<2x32xf32> -> vector<2x32xf32>
    %c0_98 = arith.constant 0 : index
    %c0_99 = arith.constant 0 : index
    %c0_100 = arith.constant 0 : index
    %126 = vector.load %arg12[%c0_98, %c0_99, %c0_100] : memref<4x32x128xf32, #tpu.memory_space<vmem>>, vector<1x32x128xf32>
    %127 = vector.shape_cast %126 : vector<1x32x128xf32> to vector<32x128xf32>
    %cst_101 = arith.constant dense<0.000000e+00> : vector<2x128xf32>
    %128 = tpu.matmul %125, %127, %cst_101 {dimension_numbers = #tpu.dot_dimension_numbers<[1], [0], [0], [1], [0, 0, 1, 1], [], []>} : vector<2x32xf32>, vector<32x128xf32>, vector<2x128xf32> -> vector<2x128xf32>
    %129 = arith.addf %122, %128 : vector<2x128xf32>
    %c1_102 = arith.constant 1 : index
    %c0_103 = arith.constant 0 : index
    %c0_104 = arith.constant 0 : index
    %130 = vector.load %arg11[%c1_102, %c0_103, %c0_104] : memref<4x2x8xf32, #tpu.memory_space<vmem>>, vector<1x2x8xf32>
    %131 = vector.shape_cast %130 : vector<1x2x8xf32> to vector<2x8xf32>
    %cst_105 = arith.constant dense<0.000000e+00> : vector<2x32xf32>
    %132 = tpu.matmul %131, %121, %cst_105 {dimension_numbers = #tpu.dot_dimension_numbers<[1], [0], [0], [1], [0, 0, 1, 1], [], []>} : vector<2x8xf32>, vector<8x32xf32>, vector<2x32xf32> -> vector<2x32xf32>
    %c1_106 = arith.constant 1 : index
    %c0_107 = arith.constant 0 : index
    %c0_108 = arith.constant 0 : index
    %133 = vector.load %arg12[%c1_106, %c0_107, %c0_108] : memref<4x32x128xf32, #tpu.memory_space<vmem>>, vector<1x32x128xf32>
    %134 = vector.shape_cast %133 : vector<1x32x128xf32> to vector<32x128xf32>
    %cst_109 = arith.constant dense<0.000000e+00> : vector<2x128xf32>
    %135 = tpu.matmul %132, %134, %cst_109 {dimension_numbers = #tpu.dot_dimension_numbers<[1], [0], [0], [1], [0, 0, 1, 1], [], []>} : vector<2x32xf32>, vector<32x128xf32>, vector<2x128xf32> -> vector<2x128xf32>
    %136 = arith.addf %129, %135 : vector<2x128xf32>
    %c2_110 = arith.constant 2 : index
    %c0_111 = arith.constant 0 : index
    %c0_112 = arith.constant 0 : index
    %137 = vector.load %arg11[%c2_110, %c0_111, %c0_112] : memref<4x2x8xf32, #tpu.memory_space<vmem>>, vector<1x2x8xf32>
    %138 = vector.shape_cast %137 : vector<1x2x8xf32> to vector<2x8xf32>
    %cst_113 = arith.constant dense<0.000000e+00> : vector<2x32xf32>
    %139 = tpu.matmul %138, %121, %cst_113 {dimension_numbers = #tpu.dot_dimension_numbers<[1], [0], [0], [1], [0, 0, 1, 1], [], []>} : vector<2x8xf32>, vector<8x32xf32>, vector<2x32xf32> -> vector<2x32xf32>
    %c2_114 = arith.constant 2 : index
    %c0_115 = arith.constant 0 : index
    %c0_116 = arith.constant 0 : index
    %140 = vector.load %arg12[%c2_114, %c0_115, %c0_116] : memref<4x32x128xf32, #tpu.memory_space<vmem>>, vector<1x32x128xf32>
    %141 = vector.shape_cast %140 : vector<1x32x128xf32> to vector<32x128xf32>
    %cst_117 = arith.constant dense<0.000000e+00> : vector<2x128xf32>
    %142 = tpu.matmul %139, %141, %cst_117 {dimension_numbers = #tpu.dot_dimension_numbers<[1], [0], [0], [1], [0, 0, 1, 1], [], []>} : vector<2x32xf32>, vector<32x128xf32>, vector<2x128xf32> -> vector<2x128xf32>
    %143 = arith.addf %136, %142 : vector<2x128xf32>
    %c3_118 = arith.constant 3 : index
    %c0_119 = arith.constant 0 : index
    %c0_120 = arith.constant 0 : index
    %144 = vector.load %arg11[%c3_118, %c0_119, %c0_120] : memref<4x2x8xf32, #tpu.memory_space<vmem>>, vector<1x2x8xf32>
    %145 = vector.shape_cast %144 : vector<1x2x8xf32> to vector<2x8xf32>
    %cst_121 = arith.constant dense<0.000000e+00> : vector<2x32xf32>
    %146 = tpu.matmul %145, %121, %cst_121 {dimension_numbers = #tpu.dot_dimension_numbers<[1], [0], [0], [1], [0, 0, 1, 1], [], []>} : vector<2x8xf32>, vector<8x32xf32>, vector<2x32xf32> -> vector<2x32xf32>
    %c3_122 = arith.constant 3 : index
    %c0_123 = arith.constant 0 : index
    %c0_124 = arith.constant 0 : index
    %147 = vector.load %arg12[%c3_122, %c0_123, %c0_124] : memref<4x32x128xf32, #tpu.memory_space<vmem>>, vector<1x32x128xf32>
    %148 = vector.shape_cast %147 : vector<1x32x128xf32> to vector<32x128xf32>
    %cst_125 = arith.constant dense<0.000000e+00> : vector<2x128xf32>
    %149 = tpu.matmul %146, %148, %cst_125 {dimension_numbers = #tpu.dot_dimension_numbers<[1], [0], [0], [1], [0, 0, 1, 1], [], []>} : vector<2x32xf32>, vector<32x128xf32>, vector<2x128xf32> -> vector<2x128xf32>
    %150 = arith.addf %143, %149 : vector<2x128xf32>
    %c0_126 = arith.constant 0 : index
    %c0_127 = arith.constant 0 : index
    %151 = vector.load %arg13[%c0_126, %c0_127] : memref<1x128xf32, #tpu.memory_space<vmem>>, vector<1x128xf32>
    %152 = vector.broadcast %151 : vector<1x128xf32> to vector<2x128xf32>
    %153 = arith.addf %150, %152 : vector<2x128xf32>
    %c0_128 = arith.constant 0 : index
    %c0_129 = arith.constant 0 : index
    %154 = vector.load %arg14[%c0_128, %c0_129] : memref<2x128xf32, #tpu.memory_space<vmem>>, vector<2x128xf32>
    tpu.vector_store %arg14[%c0_128, %c0_129], %153 {strides = array<i32>} : memref<2x128xf32, #tpu.memory_space<vmem>>, vector<2x128xf32>,
    return
  }
  func.func @transform_0(%arg0: i32) -> (i32, i32) {
    %c0_i32 = arith.constant 0 : i32
    %c0_i32_0 = arith.constant 0 : i32
    %c0_i32_1 = arith.constant 0 : i32
    return %c0_i32, %c0_i32_0 : i32, i32
  }
  func.func @transform_1(%arg0: i32) -> (i32, i32) {
    %c0_i32 = arith.constant 0 : i32
    %c0_i32_0 = arith.constant 0 : i32
    %c0_i32_1 = arith.constant 0 : i32
    return %c0_i32, %c0_i32_0 : i32, i32
  }
  func.func @transform_2(%arg0: i32) -> (i32, i32) {
    %c0_i32 = arith.constant 0 : i32
    %c0_i32_0 = arith.constant 0 : i32
    %c0_i32_1 = arith.constant 0 : i32
    return %c0_i32, %c0_i32_0 : i32, i32
  }
  func.func @transform_3(%arg0: i32) -> (i32, i32, i32) {
    %c0_i32 = arith.constant 0 : i32
    %c0_i32_0 = arith.constant 0 : i32
    %c0_i32_1 = arith.constant 0 : i32
    %c0_i32_2 = arith.constant 0 : i32
    return %c0_i32, %c0_i32_0, %c0_i32_1 : i32, i32, i32
  }
  func.func @transform_4(%arg0: i32) -> (i32, i32, i32) {
    %c0_i32 = arith.constant 0 : i32
    %c0_i32_0 = arith.constant 0 : i32
    %c0_i32_1 = arith.constant 0 : i32
    %c0_i32_2 = arith.constant 0 : i32
    return %c0_i32, %c0_i32_0, %c0_i32_1 : i32, i32, i32
  }
  func.func @transform_5(%arg0: i32) -> (i32, i32, i32) {
    %c0_i32 = arith.constant 0 : i32
    %c0_i32_0 = arith.constant 0 : i32
    %c0_i32_1 = arith.constant 0 : i32
    %c0_i32_2 = arith.constant 0 : i32
    return %c0_i32, %c0_i32_0, %c0_i32_1 : i32, i32, i32
  }
  func.func @transform_6(%arg0: i32) -> (i32, i32, i32) {
    %c0_i32 = arith.constant 0 : i32
    %c0_i32_0 = arith.constant 0 : i32
    %c0_i32_1 = arith.constant 0 : i32
    %c0_i32_2 = arith.constant 0 : i32
    return %c0_i32, %c0_i32_0, %c0_i32_1 : i32, i32, i32
  }
  func.func @transform_7(%arg0: i32) -> (i32, i32, i32) {
    %c0_i32 = arith.constant 0 : i32
    %c0_i32_0 = arith.constant 0 : i32
    %c0_i32_1 = arith.constant 0 : i32
    %c0_i32_2 = arith.constant 0 : i32
    return %c0_i32, %c0_i32_0, %c0_i32_1 : i32, i32, i32
  }
  func.func @transform_8(%arg0: i32) -> (i32, i32, i32) {
    %c0_i32 = arith.constant 0 : i32
    %c0_i32_0 = arith.constant 0 : i32
    %c0_i32_1 = arith.constant 0 : i32
    %c0_i32_2 = arith.constant 0 : i32
    return %c0_i32, %c0_i32_0, %c0_i32_1 : i32, i32, i32
  }
  func.func @transform_9(%arg0: i32) -> (i32, i32, i32) {
    %c0_i32 = arith.constant 0 : i32
    %c0_i32_0 = arith.constant 0 : i32
    %c0_i32_1 = arith.constant 0 : i32
    %c0_i32_2 = arith.constant 0 : i32
    return %c0_i32, %c0_i32_0, %c0_i32_1 : i32, i32, i32
  }
  func.func @transform_10(%arg0: i32) -> (i32, i32, i32) {
    %c0_i32 = arith.constant 0 : i32
    %c0_i32_0 = arith.constant 0 : i32
    %c0_i32_1 = arith.constant 0 : i32
    %c0_i32_2 = arith.constant 0 : i32
    return %c0_i32, %c0_i32_0, %c0_i32_1 : i32, i32, i32
  }
  func.func @transform_11(%arg0: i32) -> (i32, i32, i32) {
    %c0_i32 = arith.constant 0 : i32
    %c0_i32_0 = arith.constant 0 : i32
    %c0_i32_1 = arith.constant 0 : i32
    %c0_i32_2 = arith.constant 0 : i32
    return %c0_i32, %c0_i32_0, %c0_i32_1 : i32, i32, i32
  }
  func.func @transform_12(%arg0: i32) -> (i32, i32) {
    %c0_i32 = arith.constant 0 : i32
    %c0_i32_0 = arith.constant 0 : i32
    %c0_i32_1 = arith.constant 0 : i32
    return %c0_i32, %c0_i32_0 : i32, i32
  }
  func.func @transform_13(%arg0: i32) -> (i32, i32) {
    %c0_i32 = arith.constant 0 : i32
    %c0_i32_0 = arith.constant 0 : i32
    %c0_i32_1 = arith.constant 0 : i32
    return %c0_i32, %c0_i32_0 : i32, i32
  }
}

</mosaic_0001>

<llo_original>
// kernel: tpu_custom_call.1
$region0: #{tpu_custom_call.1}
  #allocation0 [shape = 'u32[]', space=smem, size = 0x4, offset = 0x4, fixed_abs, tag = 'smem constant byte address 0x4 - core index']
  #allocation1 [shape = 'u32[144,128]{1,0:T(1,128)}', space=vmem, size = 0x12000, scoped, tag = 'internal scratch']
  %s0 = inlined_call_operand.vmem [shape: f32[32,4], index: 0, kind: input, shape index: {}]
  %s1 = inlined_call_operand.vmem [shape: f32[4,32], index: 1, kind: input, shape index: {}]
  %s2 = inlined_call_operand.hbm [shape: f32[1,32], index: 2, kind: input, shape index: {}]
  %s3 = inlined_call_operand.hbm [shape: f32[6,32,32], index: 3, kind: input, shape index: {}]
  %s4 = inlined_call_operand.vmem [shape: f32[2,1,32], index: 4, kind: input, shape index: {}]
  %s5 = inlined_call_operand.hbm [shape: f32[2,1,32], index: 5, kind: input, shape index: {}]
  %s6 = inlined_call_operand.hbm [shape: f32[2,32,32], index: 6, kind: input, shape index: {}]
  %s7 = inlined_call_operand.vmem [shape: f32[3,16,32], index: 7, kind: input, shape index: {}]
  %s8 = inlined_call_operand.hbm [shape: f32[2,16,16], index: 8, kind: input, shape index: {}]
  %s9 = inlined_call_operand.hbm [shape: f32[3,8,16], index: 9, kind: input, shape index: {}]
  %s10 = inlined_call_operand.vmem [shape: f32[4,2,8], index: 10, kind: input, shape index: {}]
  %s11 = inlined_call_operand.hbm [shape: f32[4,32,128], index: 11, kind: input, shape index: {}]
  %s12 = inlined_call_operand.vmem [shape: f32[1,128], index: 12, kind: input, shape index: {}]
  %s13 = inlined_call_operand.hbm [shape: f32[2,128], index: 13, kind: output, shape index: {}]
  %s14 = sld [smem:[#allocation0]]
  $region90: #{tpu_custom_call.1} parent=0
    _
  %s16 = ssub.s32 1, %s14
  %s17 = scalar_select 0, %s16, %s14
  $region1: #{tpu_custom_call.1} parent=0
    #allocation2 [shape = 'u8[512]{0}', space=vmem, size = 0x400, scoped, tag = 'input window, operand 2, single buffered']
    #allocation3 [shape = 's32[1]{0}', space=sflag, size = 0x4, scoped, tag = 'scoped memory for tpu_custom_call.1']
    #allocation4 [shape = 's32[1]{0}', space=sflag, size = 0x4, scoped, tag = 'scoped memory for tpu_custom_call.1']
    #allocation5 [shape = 'u8[98304]{0}', space=vmem, size = 0x18000, scoped, tag = 'input window, operand 3, single buffered']
    #allocation6 [shape = 's32[1]{0}', space=sflag, size = 0x4, scoped, tag = 'scoped memory for tpu_custom_call.1']
    #allocation7 [shape = 'u8[1024]{0}', space=vmem, size = 0x400, scoped, tag = 'input window, operand 5, single buffered']
    #allocation8 [shape = 'u8[32768]{0}', space=vmem, size = 0x8000, scoped, tag = 'input window, operand 6, single buffered']
    #allocation9 [shape = 's32[1]{0}', space=sflag, size = 0x4, scoped, tag = 'scoped memory for tpu_custom_call.1']
    #allocation10 [shape = 'u8[16384]{0}', space=vmem, size = 0x4000, scoped, tag = 'input window, operand 8, single buffered']
    #allocation11 [shape = 'u8[12288]{0}', space=vmem, size = 0x3000, scoped, tag = 'input window, operand 9, single buffered']
    #allocation12 [shape = 's32[1]{0}', space=sflag, size = 0x4, scoped, tag = 'scoped memory for tpu_custom_call.1']
    #allocation13 [shape = 'u8[65536]{0}', space=vmem, size = 0x10000, scoped, tag = 'input window, operand 11, single buffered']
    #allocation14 [shape = 'u8[1024]{0}', space=vmem, size = 0x400, scoped, tag = 'output window, operand 0, single buffered']
    %18 = vsyncpa [#allocation3], 0
    %19 = vsyncpa [#allocation6], 0
    %20 = vsyncpa [#allocation9], 0
    %21 = vsyncpa [#allocation12], 0
    %22 = vsyncpa [#allocation4], 0
    // Predicated region
    $region2: #{tpu_custom_call.1} parent=1 // pred_check
      _
    $region3: #{tpu_custom_call.1} parent=1 // pred_check_branch
      %24 = sbr.rel (0) target = $region5
    $region4: #{tpu_custom_call.1} parent=1 // pred_region
      _
    $region5: #{tpu_custom_call.1} parent=1 // pred_fallthru
      _
    // Predicated region
    $region6: #{tpu_custom_call.1} parent=1 // pred_check
      _
    $region7: #{tpu_custom_call.1} parent=1 // pred_check_branch
      %26 = sbr.rel (0) target = $region9
    $region8: #{tpu_custom_call.1} parent=1 // pred_region
      _
    $region9: #{tpu_custom_call.1} parent=1 // pred_fallthru
      _
    // Predicated region
    $region10: #{tpu_custom_call.1} parent=1 // pred_check
      _
    $region11: #{tpu_custom_call.1} parent=1 // pred_check_branch
      %28 = sbr.rel (0) target = $region13
    $region12: #{tpu_custom_call.1} parent=1 // pred_region
      %s30 = ssub.s32 16, 16
      %31 = vsyncadd [#allocation3], %s30
      %s33 = sshll.u32 [#allocation2], 4
      %s34 = int_to_ptr.vmem [resolvable:$true] %s33
      %36 = dma.hbm_to_vmem [thread:$0]  %s2, 16, %s34, [#allocation3]
    $region13: #{tpu_custom_call.1} parent=1 // pred_fallthru
      _
    // Predicated region
    $region14: #{tpu_custom_call.1} parent=1 // pred_check
      _
    $region15: #{tpu_custom_call.1} parent=1 // pred_check_branch
      %38 = sbr.rel (0) target = $region17
    $region16: #{tpu_custom_call.1} parent=1 // pred_region
      %s40 = ssub.s32 3072, 3072
      %41 = vsyncadd [#allocation6], %s40
      %s42 = sshll.u32 [#allocation5], 4
      %s43 = int_to_ptr.vmem [resolvable:$true] %s42
      %48 = dma.hbm_to_vmem [thread:$0]  %s3, 3072, %s43, [#allocation6], 128, 128, 8
    $region17: #{tpu_custom_call.1} parent=1 // pred_fallthru
      _
    // Predicated region
    $region18: #{tpu_custom_call.1} parent=1 // pred_check
      _
    $region19: #{tpu_custom_call.1} parent=1 // pred_check_branch
      %50 = sbr.rel (0) target = $region21
    $region20: #{tpu_custom_call.1} parent=1 // pred_region
      _
    $region21: #{tpu_custom_call.1} parent=1 // pred_fallthru
      _
    // Predicated region
    $region22: #{tpu_custom_call.1} parent=1 // pred_check
      _
    $region23: #{tpu_custom_call.1} parent=1 // pred_check_branch
      %52 = sbr.rel (0) target = $region25
    $region24: #{tpu_custom_call.1} parent=1 // pred_region
      %s54 = ssub.s32 32, 32
      %55 = vsyncadd [#allocation6], %s54
      %s56 = sshll.u32 [#allocation7], 4
      %s57 = int_to_ptr.vmem [resolvable:$true] %s56
      %62 = dma.hbm_to_vmem [thread:$0]  %s5, 32, %s57, [#allocation6], 16, 16, 1
    $region25: #{tpu_custom_call.1} parent=1 // pred_fallthru
      _
    // Predicated region
    $region26: #{tpu_custom_call.1} parent=1 // pred_check
      _
    $region27: #{tpu_custom_call.1} parent=1 // pred_check_branch
      %64 = sbr.rel (0) target = $region29
    $region28: #{tpu_custom_call.1} parent=1 // pred_region
      %s66 = ssub.s32 1024, 1024
      %67 = vsyncadd [#allocation9], %s66
      %s68 = sshll.u32 [#allocation8], 4
      %s69 = int_to_ptr.vmem [resolvable:$true] %s68
      %74 = dma.hbm_to_vmem [thread:$0]  %s6, 1024, %s69, [#allocation9], 128, 128, 8
    $region29: #{tpu_custom_call.1} parent=1 // pred_fallthru
      _
    // Predicated region
    $region30: #{tpu_custom_call.1} parent=1 // pred_check
      _
    $region31: #{tpu_custom_call.1} parent=1 // pred_check_branch
      %76 = sbr.rel (0) target = $region33
    $region32: #{tpu_custom_call.1} parent=1 // pred_region
      _
    $region33: #{tpu_custom_call.1} parent=1 // pred_fallthru
      _
    // Predicated region
    $region34: #{tpu_custom_call.1} parent=1 // pred_check
      _
    $region35: #{tpu_custom_call.1} parent=1 // pred_check_branch
      %78 = sbr.rel (0) target = $region37
    $region36: #{tpu_custom_call.1} parent=1 // pred_region
      %s80 = ssub.s32 512, 512
      %81 = vsyncadd [#allocation9], %s80
      %s82 = sshll.u32 [#allocation10], 4
      %s83 = int_to_ptr.vmem [resolvable:$true] %s82
      %88 = dma.hbm_to_vmem [thread:$0]  %s8, 512, %s83, [#allocation9], 128, 128, 8
    $region37: #{tpu_custom_call.1} parent=1 // pred_fallthru
      _
    // Predicated region
    $region38: #{tpu_custom_call.1} parent=1 // pred_check
      _
    $region39: #{tpu_custom_call.1} parent=1 // pred_check_branch
      %90 = sbr.rel (0) target = $region41
    $region40: #{tpu_custom_call.1} parent=1 // pred_region
      %s92 = ssub.s32 384, 384
      %93 = vsyncadd [#allocation12], %s92
      %s94 = sshll.u32 [#allocation11], 4
      %s95 = int_to_ptr.vmem [resolvable:$true] %s94
      %100 = dma.hbm_to_vmem [thread:$0]  %s9, 384, %s95, [#allocation12], 128, 128, 8
    $region41: #{tpu_custom_call.1} parent=1 // pred_fallthru
      _
    // Predicated region
    $region42: #{tpu_custom_call.1} parent=1 // pred_check
      _
    $region43: #{tpu_custom_call.1} parent=1 // pred_check_branch
      %102 = sbr.rel (0) target = $region45
    $region44: #{tpu_custom_call.1} parent=1 // pred_region
      _
    $region45: #{tpu_custom_call.1} parent=1 // pred_fallthru
      _
    // Predicated region
    $region46: #{tpu_custom_call.1} parent=1 // pred_check
      _
    $region47: #{tpu_custom_call.1} parent=1 // pred_check_branch
      %104 = sbr.rel (0) target = $region49
    $region48: #{tpu_custom_call.1} parent=1 // pred_region
      %s106 = ssub.s32 2048, 2048
      %107 = vsyncadd [#allocation12], %s106
      %s108 = sshll.u32 [#allocation13], 4
      %s109 = int_to_ptr.vmem [resolvable:$true] %s108
      %114 = dma.hbm_to_vmem [thread:$0]  %s11, 2048, %s109, [#allocation12], 128, 128, 8
    $region49: #{tpu_custom_call.1} parent=1 // pred_fallthru
      _
    // Predicated region
    $region50: #{tpu_custom_call.1} parent=1 // pred_check
      _
    $region51: #{tpu_custom_call.1} parent=1 // pred_check_branch
      %116 = sbr.rel (0) target = $region53
    $region52: #{tpu_custom_call.1} parent=1 // pred_region
      _
    $region53: #{tpu_custom_call.1} parent=1 // pred_fallthru
      _
    // Predicated region
    $region54: #{tpu_custom_call.1} parent=1 // pred_check
      _
    $region55: #{tpu_custom_call.1} parent=1 // pred_check_branch
      %118 = sbr.rel (0) target = $region57
    $region56: #{tpu_custom_call.1} parent=1 // pred_region
      %119 = dma.done [#allocation3], 16
    $region57: #{tpu_custom_call.1} parent=1 // pred_fallthru
      _
    // Predicated region
    $region58: #{tpu_custom_call.1} parent=1 // pred_check
      _
    $region59: #{tpu_custom_call.1} parent=1 // pred_check_branch
      %121 = sbr.rel (0) target = $region61
    $region60: #{tpu_custom_call.1} parent=1 // pred_region
      %122 = dma.done [#allocation6], 3072
    $region61: #{tpu_custom_call.1} parent=1 // pred_fallthru
      _
    // Predicated region
    $region62: #{tpu_custom_call.1} parent=1 // pred_check
      _
    $region63: #{tpu_custom_call.1} parent=1 // pred_check_branch
      %124 = sbr.rel (0) target = $region65
    $region64: #{tpu_custom_call.1} parent=1 // pred_region
      %125 = dma.done [#allocation6], 32
    $region65: #{tpu_custom_call.1} parent=1 // pred_fallthru
      _
    // Predicated region
    $region66: #{tpu_custom_call.1} parent=1 // pred_check
      _
    $region67: #{tpu_custom_call.1} parent=1 // pred_check_branch
      %127 = sbr.rel (0) target = $region69
    $region68: #{tpu_custom_call.1} parent=1 // pred_region
      %128 = dma.done [#allocation9], 1024
    $region69: #{tpu_custom_call.1} parent=1 // pred_fallthru
      _
    // Predicated region
    $region70: #{tpu_custom_call.1} parent=1 // pred_check
      _
    $region71: #{tpu_custom_call.1} parent=1 // pred_check_branch
      %130 = sbr.rel (0) target = $region73
    $region72: #{tpu_custom_call.1} parent=1 // pred_region
      %131 = dma.done [#allocation9], 512
    $region73: #{tpu_custom_call.1} parent=1 // pred_fallthru
      _
    // Predicated region
    $region74: #{tpu_custom_call.1} parent=1 // pred_check
      _
    $region75: #{tpu_custom_call.1} parent=1 // pred_check_branch
      %133 = sbr.rel (0) target = $region77
    $region76: #{tpu_custom_call.1} parent=1 // pred_region
      %134 = dma.done [#allocation12], 384
    $region77: #{tpu_custom_call.1} parent=1 // pred_fallthru
      _
    // Predicated region
    $region78: #{tpu_custom_call.1} parent=1 // pred_check
      _
    $region79: #{tpu_custom_call.1} parent=1 // pred_check_branch
      %136 = sbr.rel (0) target = $region81
    $region80: #{tpu_custom_call.1} parent=1 // pred_region
      %137 = dma.done [#allocation12], 2048
    $region81: #{tpu_custom_call.1} parent=1 // pred_fallthru
      _
    %v138 = vld [vmem:[%s0] sm:$0xff]
    %v139 = vld [vmem:[%s0 + $0x8] sm:$0xff]
    %v140 = vld [vmem:[%s0 + $0x10] sm:$0xff]
    %v141 = vld [vmem:[%s0 + $0x18] sm:$0xff]
    %v142 = vld [vmem:[%s1] sm:$0xf]
    %v143 = vld [vmem:[#allocation2] sm:$0x1]
    %v145 = vlaneseq
    %v146 = vshrl.u32 %v145, 7
    %v147 = vsub.s32 0, %v146
    %v148 = vrot.slane %v143, %v147
    %vm150 = vcmask 31744
    %v152 = vsel %vm150, %v138, 0
    %v155 = vsel %vm150, %v139, 0
    %v158 = vsel %vm150, %v140, 0
    %v161 = vsel %vm150, %v141, 0
    %vm163 = vcmask 1043456
    %v165 = vsel %vm163, %v142, 0
    %167 = vmatprep.subr.mxu0 0.0
    %168 = vmatpush1.msra.mxu0 %v165
    %169 = vmatprep.subr.mxu0 0.0
    %170 = vmatpush1.msra.mxu0 0.0
    %171 = vmatprep.subr.mxu0 0.0
    %172 = vmatpush1.msra.mxu0 0.0
    %173 = vmatprep.subr.mxu0 0.0
    %174 = vmatpush1.msra.mxu0 0.0
    %175 = vmatprep.subr.mxu0 0.0
    %176 = vmatpush1.msra.mxu0 0.0
    %177 = vmatprep.subr.mxu0 0.0
    %178 = vmatpush1.msra.mxu0 0.0
    %179 = vmatprep.subr.mxu0 0.0
    %180 = vmatpush1.msra.mxu0 0.0
    %181 = vmatprep.subr.mxu0 0.0
    %182 = vmatpush1.msra.mxu0 0.0
    %183 = vmatprep.subr.mxu0 0.0
    %184 = vmatpush1.msra.mxu0 0.0
    %185 = vmatprep.subr.mxu0 0.0
    %186 = vmatpush1.msra.mxu0 0.0
    %187 = vmatprep.subr.mxu0 0.0
    %188 = vmatpush1.msra.mxu0 0.0
    %189 = vmatprep.subr.mxu0 0.0
    %190 = vmatpush1.msra.mxu0 0.0
    %191 = vmatprep.subr.mxu0 0.0
    %192 = vmatpush1.msra.mxu0 0.0
    %193 = vmatprep.subr.mxu0 0.0
    %194 = vmatpush1.msra.mxu0 0.0
    %195 = vmatprep.subr.mxu0 0.0
    %196 = vmatpush1.msra.mxu0 0.0
    %197 = vmatprep.subr.mxu0 0.0
    %198 = vmatpush1.msra.mxu0 0.0
    %199 = vmatprep.subr.mxu0 0.0
    %200 = vmatpush1.msra.mxu0 0.0
    %201 = vmatprep.subr.mxu0 0.0
    %202 = vmatpush1.msra.mxu0 0.0
    %203 = vmatprep.subr.mxu0 0.0
    %204 = vmatpush1.msra.mxu0 0.0
    %205 = vmatprep.subr.mxu0 0.0
    %206 = vmatpush1.msra.mxu0 0.0
    %207 = vmatprep.subr.mxu0 0.0
    %208 = vmatpush1.msra.mxu0 0.0
    %209 = vmatprep.subr.mxu0 0.0
    %210 = vmatpush1.msra.mxu0 0.0
    %211 = vmatprep.subr.mxu0 0.0
    %212 = vmatpush1.msra.mxu0 0.0
    %213 = vmatprep.subr.mxu0 0.0
    %214 = vmatpush1.msra.mxu0 0.0
    %215 = vmatprep.subr.mxu0 0.0
    %216 = vmatpush1.msra.mxu0 0.0
    %217 = vmatprep.subr.mxu0 0.0
    %218 = vmatpush1.msra.mxu0 0.0
    %219 = vmatprep.subr.mxu0 0.0
    %220 = vmatpush1.msra.mxu0 0.0
    %221 = vmatprep.subr.mxu0 0.0
    %222 = vmatpush1.msra.mxu0 0.0
    %223 = vmatprep.subr.mxu0 0.0
    %224 = vmatpush1.msra.mxu0 0.0
    %225 = vmatprep.subr.mxu0 0.0
    %226 = vmatpush1.msra.mxu0 0.0
    %227 = vmatprep.subr.mxu0 0.0
    %228 = vmatpush1.msra.mxu0 0.0
    %229 = vmatprep.subr.mxu0 0.0
    %230 = vmatpush1.msra.mxu0 0.0
    %231 = vmatprep.mubr.f32.mxu0 0.0
    %232 = vmatmul.mubr.f32.gmra.mrb[0].mxu0 %v152
    %v233 = vpop.f32.mrb[0].mxu0
    %v234 = vadd.f32 %v148, %v233
    %v235 = vpop.f32.mrb[0].mxu0
    %236 = vmatprep.mubr.f32.mxu0 0.0
    %237 = vmatmul.mubr.f32.gmra.mrb[0].mxu0 %v155
    %v238 = vpop.f32.mrb[0].mxu0
    %v239 = vadd.f32 %v148, %v238
    %v240 = vpop.f32.mrb[0].mxu0
    %241 = vmatprep.mubr.f32.mxu0 0.0
    %242 = vmatmul.mubr.f32.gmra.mrb[0].mxu0 %v158
    %v243 = vpop.f32.mrb[0].mxu0
    %v244 = vadd.f32 %v148, %v243
    %v245 = vpop.f32.mrb[0].mxu0
    %246 = vmatprep.mubr.f32.mxu0 0.0
    %247 = vmatmul.mubr.f32.gmra.mrb[0].mxu0 %v161
    %v248 = vpop.f32.mrb[0].mxu0
    %v249 = vadd.f32 %v148, %v248
    %v250 = vpop.f32.mrb[0].mxu0
    %251 = vdwg.mxu0
    %v252 = vld [vmem:[#allocation5] sm:$0xff]
    %v253 = vld [vmem:[#allocation5 + $0x8] sm:$0xff]
    %v254 = vld [vmem:[#allocation5 + $0x10] sm:$0xff]
    %v255 = vld [vmem:[#allocation5 + $0x18] sm:$0xff]
    %s256 = scalar_lea.vmem [#allocation5], 32
    %v257 = vld [vmem:[%s256] sm:$0xff]
    %v258 = vld [vmem:[%s256 + $0x8] sm:$0xff]
    %v259 = vld [vmem:[%s256 + $0x10] sm:$0xff]
    %v260 = vld [vmem:[%s256 + $0x18] sm:$0xff]
    %s261 = scalar_lea.vmem [#allocation5], 64
    %v262 = vld [vmem:[%s261] sm:$0xff]
    %v263 = vld [vmem:[%s261 + $0x8] sm:$0xff]
    %v264 = vld [vmem:[%s261 + $0x10] sm:$0xff]
    %v265 = vld [vmem:[%s261 + $0x18] sm:$0xff]
    %v266 = vld [vmem:[%s4] sm:$0x1]
    %v267 = vld [vmem:[#allocation7] sm:$0x1]
    %v268 = vld [vmem:[#allocation8] sm:$0xff]
    %v269 = vld [vmem:[#allocation8 + $0x8] sm:$0xff]
    %v270 = vld [vmem:[#allocation8 + $0x10] sm:$0xff]
    %v271 = vld [vmem:[#allocation8 + $0x18] sm:$0xff]
    %vm272 = vcmask 261120
    %v274 = vsel %vm272, %v268, 0
    %v277 = vsel %vm272, %v269, 0
    %v280 = vsel %vm272, %v270, 0
    %v283 = vsel %vm272, %v271, 0
    %285 = vmatprep.subr.mxu0 0.0
    %286 = vmatpush1.msra.mxu0 %v234
    %287 = vmatprep.subr.mxu0 0.0
    %288 = vmatpush1.msra.mxu0 %v239
    %289 = vmatprep.subr.mxu0 0.0
    %290 = vmatpush1.msra.mxu0 %v244
    %291 = vmatprep.subr.mxu0 0.0
    %292 = vmatpush1.msra.mxu0 %v249
    %293 = vmatprep.subr.mxu0 0.0
    %294 = vmatpush1.msra.mxu0 0.0
    %295 = vmatprep.subr.mxu0 0.0
    %296 = vmatpush1.msra.mxu0 0.0
    %297 = vmatprep.subr.mxu0 0.0
    %298 = vmatpush1.msra.mxu0 0.0
    %299 = vmatprep.subr.mxu0 0.0
    %300 = vmatpush1.msra.mxu0 0.0
    %301 = vmatprep.subr.mxu0 0.0
    %302 = vmatpush1.msra.mxu0 0.0
    %303 = vmatprep.subr.mxu0 0.0
    %304 = vmatpush1.msra.mxu0 0.0
    %305 = vmatprep.subr.mxu0 0.0
    %306 = vmatpush1.msra.mxu0 0.0
    %307 = vmatprep.subr.mxu0 0.0
    %308 = vmatpush1.msra.mxu0 0.0
    %309 = vmatprep.subr.mxu0 0.0
    %310 = vmatpush1.msra.mxu0 0.0
    %311 = vmatprep.subr.mxu0 0.0
    %312 = vmatpush1.msra.mxu0 0.0
    %313 = vmatprep.subr.mxu0 0.0
    %314 = vmatpush1.msra.mxu0 0.0
    %315 = vmatprep.subr.mxu0 0.0
    %316 = vmatpush1.msra.mxu0 0.0
    %317 = vmatprep.subr.mxu0 0.0
    %318 = vmatpush1.msra.mxu0 0.0
    %319 = vmatprep.subr.mxu0 0.0
    %320 = vmatpush1.msra.mxu0 0.0
    %321 = vmatprep.subr.mxu0 0.0
    %322 = vmatpush1.msra.mxu0 0.0
    %323 = vmatprep.subr.mxu0 0.0
    %324 = vmatpush1.msra.mxu0 0.0
    %325 = vmatprep.subr.mxu0 0.0
    %326 = vmatpush1.msra.mxu0 0.0
    %327 = vmatprep.subr.mxu0 0.0
    %328 = vmatpush1.msra.mxu0 0.0
    %329 = vmatprep.subr.mxu0 0.0
    %330 = vmatpush1.msra.mxu0 0.0
    %331 = vmatprep.subr.mxu0 0.0
    %332 = vmatpush1.msra.mxu0 0.0
    %333 = vmatprep.subr.mxu0 0.0
    %334 = vmatpush1.msra.mxu0 0.0
    %335 = vmatprep.subr.mxu0 0.0
    %336 = vmatpush1.msra.mxu0 0.0
    %337 = vmatprep.subr.mxu0 0.0
    %338 = vmatpush1.msra.mxu0 0.0
    %339 = vmatprep.subr.mxu0 0.0
    %340 = vmatpush1.msra.mxu0 0.0
    %341 = vmatprep.subr.mxu0 0.0
    %342 = vmatpush1.msra.mxu0 0.0
    %343 = vmatprep.subr.mxu0 0.0
    %344 = vmatpush1.msra.mxu0 0.0
    %345 = vmatprep.subr.mxu0 0.0
    %346 = vmatpush1.msra.mxu0 0.0
    %347 = vmatprep.subr.mxu0 0.0
    %348 = vmatpush1.msra.mxu0 0.0
    %349 = vmatprep.mubr.f32.mxu0 0.0
    %350 = vmatmul.mubr.f32.gmra.mrb[0].mxu0 %v274
    %v351 = vpop.f32.mrb[0].mxu0
    %v352 = vadd.f32 0.0, %v351
    %v353 = vpop.f32.mrb[0].mxu0
    %354 = vmatprep.mubr.f32.mxu0 0.0
    %355 = vmatmul.mubr.f32.gmra.mrb[0].mxu0 %v277
    %v356 = vpop.f32.mrb[0].mxu0
    %v357 = vadd.f32 0.0, %v356
    %v358 = vpop.f32.mrb[0].mxu0
    %359 = vmatprep.mubr.f32.mxu0 0.0
    %360 = vmatmul.mubr.f32.gmra.mrb[0].mxu0 %v280
    %v361 = vpop.f32.mrb[0].mxu0
    %v362 = vadd.f32 0.0, %v361
    %v363 = vpop.f32.mrb[0].mxu0
    %364 = vmatprep.mubr.f32.mxu0 0.0
    %365 = vmatmul.mubr.f32.gmra.mrb[0].mxu0 %v283
    %v366 = vpop.f32.mrb[0].mxu0
    %v367 = vadd.f32 0.0, %v366
    %v368 = vpop.f32.mrb[0].mxu0
    %369 = vdwg.mxu0
    %s370 = scalar_lea.vmem [#allocation8], 32
    %v371 = vld [vmem:[%s370] sm:$0xff]
    %v372 = vld [vmem:[%s370 + $0x8] sm:$0xff]
    %v373 = vld [vmem:[%s370 + $0x10] sm:$0xff]
    %v374 = vld [vmem:[%s370 + $0x18] sm:$0xff]
    %v376 = vsel %vm272, %v371, 0
    %v379 = vsel %vm272, %v372, 0
    %v382 = vsel %vm272, %v373, 0
    %v385 = vsel %vm272, %v374, 0
    %387 = vmatprep.subr.mxu0 0.0
    %388 = vmatpush1.msra.mxu0 %v234
    %389 = vmatprep.subr.mxu0 0.0
    %390 = vmatpush1.msra.mxu0 %v239
    %391 = vmatprep.subr.mxu0 0.0
    %392 = vmatpush1.msra.mxu0 %v244
    %393 = vmatprep.subr.mxu0 0.0
    %394 = vmatpush1.msra.mxu0 %v249
    %395 = vmatprep.subr.mxu0 0.0
    %396 = vmatpush1.msra.mxu0 0.0
    %397 = vmatprep.subr.mxu0 0.0
    %398 = vmatpush1.msra.mxu0 0.0
    %399 = vmatprep.subr.mxu0 0.0
    %400 = vmatpush1.msra.mxu0 0.0
    %401 = vmatprep.subr.mxu0 0.0
    %402 = vmatpush1.msra.mxu0 0.0
    %403 = vmatprep.subr.mxu0 0.0
    %404 = vmatpush1.msra.mxu0 0.0
    %405 = vmatprep.subr.mxu0 0.0
    %406 = vmatpush1.msra.mxu0 0.0
    %407 = vmatprep.subr.mxu0 0.0
    %408 = vmatpush1.msra.mxu0 0.0
    %409 = vmatprep.subr.mxu0 0.0
    %410 = vmatpush1.msra.mxu0 0.0
    %411 = vmatprep.subr.mxu0 0.0
    %412 = vmatpush1.msra.mxu0 0.0
    %413 = vmatprep.subr.mxu0 0.0
    %414 = vmatpush1.msra.mxu0 0.0
    %415 = vmatprep.subr.mxu0 0.0
    %416 = vmatpush1.msra.mxu0 0.0
    %417 = vmatprep.subr.mxu0 0.0
    %418 = vmatpush1.msra.mxu0 0.0
    %419 = vmatprep.subr.mxu0 0.0
    %420 = vmatpush1.msra.mxu0 0.0
    %421 = vmatprep.subr.mxu0 0.0
    %422 = vmatpush1.msra.mxu0 0.0
    %423 = vmatprep.subr.mxu0 0.0
    %424 = vmatpush1.msra.mxu0 0.0
    %425 = vmatprep.subr.mxu0 0.0
    %426 = vmatpush1.msra.mxu0 0.0
    %427 = vmatprep.subr.mxu0 0.0
    %428 = vmatpush1.msra.mxu0 0.0
    %429 = vmatprep.subr.mxu0 0.0
    %430 = vmatpush1.msra.mxu0 0.0
    %431 = vmatprep.subr.mxu0 0.0
    %432 = vmatpush1.msra.mxu0 0.0
    %433 = vmatprep.subr.mxu0 0.0
    %434 = vmatpush1.msra.mxu0 0.0
    %435 = vmatprep.subr.mxu0 0.0
    %436 = vmatpush1.msra.mxu0 0.0
    %437 = vmatprep.subr.mxu0 0.0
    %438 = vmatpush1.msra.mxu0 0.0
    %439 = vmatprep.subr.mxu0 0.0
    %440 = vmatpush1.msra.mxu0 0.0
    %441 = vmatprep.subr.mxu0 0.0
    %442 = vmatpush1.msra.mxu0 0.0
    %443 = vmatprep.subr.mxu0 0.0
    %444 = vmatpush1.msra.mxu0 0.0
    %445 = vmatprep.subr.mxu0 0.0
    %446 = vmatpush1.msra.mxu0 0.0
    %447 = vmatprep.subr.mxu0 0.0
    %448 = vmatpush1.msra.mxu0 0.0
    %449 = vmatprep.subr.mxu0 0.0
    %450 = vmatpush1.msra.mxu0 0.0
    %451 = vmatprep.mubr.f32.mxu0 0.0
    %452 = vmatmul.mubr.f32.gmra.mrb[0].mxu0 %v376
    %v453 = vpop.f32.mrb[0].mxu0
    %v454 = vadd.f32 0.0, %v453
    %v455 = vpop.f32.mrb[0].mxu0
    %456 = vmatprep.mubr.f32.mxu0 0.0
    %457 = vmatmul.mubr.f32.gmra.mrb[0].mxu0 %v379
    %v458 = vpop.f32.mrb[0].mxu0
    %v459 = vadd.f32 0.0, %v458
    %v460 = vpop.f32.mrb[0].mxu0
    %461 = vmatprep.mubr.f32.mxu0 0.0
    %462 = vmatmul.mubr.f32.gmra.mrb[0].mxu0 %v382
    %v463 = vpop.f32.mrb[0].mxu0
    %v464 = vadd.f32 0.0, %v463
    %v465 = vpop.f32.mrb[0].mxu0
    %466 = vmatprep.mubr.f32.mxu0 0.0
    %467 = vmatmul.mubr.f32.gmra.mrb[0].mxu0 %v385
    %v468 = vpop.f32.mrb[0].mxu0
    %v469 = vadd.f32 0.0, %v468
    %v470 = vpop.f32.mrb[0].mxu0
    %471 = vdwg.mxu0
    %v473 = vsel %vm272, %v234, 0
    %v476 = vsel %vm272, %v239, 0
    %v479 = vsel %vm272, %v244, 0
    %v482 = vsel %vm272, %v249, 0
    %484 = vmatprep.subr.mxu0 0.0
    %485 = vmatpush1.msra.mxu0 %v257
    %486 = vmatprep.subr.mxu0 0.0
    %487 = vmatpush1.msra.mxu0 %v258
    %488 = vmatprep.subr.mxu0 0.0
    %489 = vmatpush1.msra.mxu0 %v259
    %490 = vmatprep.subr.mxu0 0.0
    %491 = vmatpush1.msra.mxu0 %v260
    %492 = vmatprep.subr.mxu0 0.0
    %493 = vmatpush1.msra.mxu0 0.0
    %494 = vmatprep.subr.mxu0 0.0
    %495 = vmatpush1.msra.mxu0 0.0
    %496 = vmatprep.subr.mxu0 0.0
    %497 = vmatpush1.msra.mxu0 0.0
    %498 = vmatprep.subr.mxu0 0.0
    %499 = vmatpush1.msra.mxu0 0.0
    %500 = vmatprep.subr.mxu0 0.0
    %501 = vmatpush1.msra.mxu0 0.0
    %502 = vmatprep.subr.mxu0 0.0
    %503 = vmatpush1.msra.mxu0 0.0
    %504 = vmatprep.subr.mxu0 0.0
    %505 = vmatpush1.msra.mxu0 0.0
    %506 = vmatprep.subr.mxu0 0.0
    %507 = vmatpush1.msra.mxu0 0.0
    %508 = vmatprep.subr.mxu0 0.0
    %509 = vmatpush1.msra.mxu0 0.0
    %510 = vmatprep.subr.mxu0 0.0
    %511 = vmatpush1.msra.mxu0 0.0
    %512 = vmatprep.subr.mxu0 0.0
    %513 = vmatpush1.msra.mxu0 0.0
    %514 = vmatprep.subr.mxu0 0.0
    %515 = vmatpush1.msra.mxu0 0.0
    %516 = vmatprep.subr.mxu0 0.0
    %517 = vmatpush1.msra.mxu0 0.0
    %518 = vmatprep.subr.mxu0 0.0
    %519 = vmatpush1.msra.mxu0 0.0
    %520 = vmatprep.subr.mxu0 0.0
    %521 = vmatpush1.msra.mxu0 0.0
    %522 = vmatprep.subr.mxu0 0.0
    %523 = vmatpush1.msra.mxu0 0.0
    %524 = vmatprep.subr.mxu0 0.0
    %525 = vmatpush1.msra.mxu0 0.0
    %526 = vmatprep.subr.mxu0 0.0
    %527 = vmatpush1.msra.mxu0 0.0
    %528 = vmatprep.subr.mxu0 0.0
    %529 = vmatpush1.msra.mxu0 0.0
    %530 = vmatprep.subr.mxu0 0.0
    %531 = vmatpush1.msra.mxu0 0.0
    %532 = vmatprep.subr.mxu0 0.0
    %533 = vmatpush1.msra.mxu0 0.0
    %534 = vmatprep.subr.mxu0 0.0
    %535 = vmatpush1.msra.mxu0 0.0
    %536 = vmatprep.subr.mxu0 0.0
    %537 = vmatpush1.msra.mxu0 0.0
    %538 = vmatprep.subr.mxu0 0.0
    %539 = vmatpush1.msra.mxu0 0.0
    %540 = vmatprep.subr.mxu0 0.0
    %541 = vmatpush1.msra.mxu0 0.0
    %542 = vmatprep.subr.mxu0 0.0
    %543 = vmatpush1.msra.mxu0 0.0
    %544 = vmatprep.subr.mxu0 0.0
    %545 = vmatpush1.msra.mxu0 0.0
    %546 = vmatprep.subr.mxu0 0.0
    %547 = vmatpush1.msra.mxu0 0.0
    %548 = vmatprep.mubr.f32.mxu0 0.0
    %549 = vmatmul.mubr.f32.gmra.mrb[0].mxu0 %v473
    %v550 = vpop.f32.mrb[0].mxu0
    %v551 = vadd.f32 0.0, %v550
    %v552 = vpop.f32.mrb[0].mxu0
    %553 = vmatprep.mubr.f32.mxu0 0.0
    %554 = vmatmul.mubr.f32.gmra.mrb[0].mxu0 %v476
    %v555 = vpop.f32.mrb[0].mxu0
    %v556 = vadd.f32 0.0, %v555
    %v557 = vpop.f32.mrb[0].mxu0
    %558 = vmatprep.mubr.f32.mxu0 0.0
    %559 = vmatmul.mubr.f32.gmra.mrb[0].mxu0 %v479
    %v560 = vpop.f32.mrb[0].mxu0
    %v561 = vadd.f32 0.0, %v560
    %v562 = vpop.f32.mrb[0].mxu0
    %563 = vmatprep.mubr.f32.mxu0 0.0
    %564 = vmatmul.mubr.f32.gmra.mrb[0].mxu0 %v482
    %v565 = vpop.f32.mrb[0].mxu0
    %v566 = vadd.f32 0.0, %v565
    %v567 = vpop.f32.mrb[0].mxu0
    %568 = vdwg.mxu0
    %v570 = vsel %vm272, %v352, 0
    %v573 = vsel %vm272, %v357, 0
    %v576 = vsel %vm272, %v362, 0
    %v579 = vsel %vm272, %v367, 0
    %581 = vmatprep.subr.mxu0 0.0
    %582 = vmatpush1.msra.mxu0 %v252
    %583 = vmatprep.subr.mxu0 0.0
    %584 = vmatpush1.msra.mxu0 %v253
    %585 = vmatprep.subr.mxu0 0.0
    %586 = vmatpush1.msra.mxu0 %v254
    %587 = vmatprep.subr.mxu0 0.0
    %588 = vmatpush1.msra.mxu0 %v255
    %589 = vmatprep.subr.mxu0 0.0
    %590 = vmatpush1.msra.mxu0 0.0
    %591 = vmatprep.subr.mxu0 0.0
    %592 = vmatpush1.msra.mxu0 0.0
    %593 = vmatprep.subr.mxu0 0.0
    %594 = vmatpush1.msra.mxu0 0.0
    %595 = vmatprep.subr.mxu0 0.0
    %596 = vmatpush1.msra.mxu0 0.0
    %597 = vmatprep.subr.mxu0 0.0
    %598 = vmatpush1.msra.mxu0 0.0
    %599 = vmatprep.subr.mxu0 0.0
    %600 = vmatpush1.msra.mxu0 0.0
    %601 = vmatprep.subr.mxu0 0.0
    %602 = vmatpush1.msra.mxu0 0.0
    %603 = vmatprep.subr.mxu0 0.0
    %604 = vmatpush1.msra.mxu0 0.0
    %605 = vmatprep.subr.mxu0 0.0
    %606 = vmatpush1.msra.mxu0 0.0
    %607 = vmatprep.subr.mxu0 0.0
    %608 = vmatpush1.msra.mxu0 0.0
    %609 = vmatprep.subr.mxu0 0.0
    %610 = vmatpush1.msra.mxu0 0.0
    %611 = vmatprep.subr.mxu0 0.0
    %612 = vmatpush1.msra.mxu0 0.0
    %613 = vmatprep.subr.mxu0 0.0
    %614 = vmatpush1.msra.mxu0 0.0
    %615 = vmatprep.subr.mxu0 0.0
    %616 = vmatpush1.msra.mxu0 0.0
    %617 = vmatprep.subr.mxu0 0.0
    %618 = vmatpush1.msra.mxu0 0.0
    %619 = vmatprep.subr.mxu0 0.0
    %620 = vmatpush1.msra.mxu0 0.0
    %621 = vmatprep.subr.mxu0 0.0
    %622 = vmatpush1.msra.mxu0 0.0
    %623 = vmatprep.subr.mxu0 0.0
    %624 = vmatpush1.msra.mxu0 0.0
    %625 = vmatprep.subr.mxu0 0.0
    %626 = vmatpush1.msra.mxu0 0.0
    %627 = vmatprep.subr.mxu0 0.0
    %628 = vmatpush1.msra.mxu0 0.0
    %629 = vmatprep.subr.mxu0 0.0
    %630 = vmatpush1.msra.mxu0 0.0
    %631 = vmatprep.subr.mxu0 0.0
    %632 = vmatpush1.msra.mxu0 0.0
    %633 = vmatprep.subr.mxu0 0.0
    %634 = vmatpush1.msra.mxu0 0.0
    %635 = vmatprep.subr.mxu0 0.0
    %636 = vmatpush1.msra.mxu0 0.0
    %637 = vmatprep.subr.mxu0 0.0
    %638 = vmatpush1.msra.mxu0 0.0
    %639 = vmatprep.subr.mxu0 0.0
    %640 = vmatpush1.msra.mxu0 0.0
    %641 = vmatprep.subr.mxu0 0.0
    %642 = vmatpush1.msra.mxu0 0.0
    %643 = vmatprep.subr.mxu0 0.0
    %644 = vmatpush1.msra.mxu0 0.0
    %645 = vmatprep.mubr.f32.mxu0 0.0
    %646 = vmatmul.mubr.f32.gmra.mrb[0].mxu0 %v570
    %v647 = vpop.f32.mrb[0].mxu0
    %v648 = vadd.f32 %v551, %v647
    %v649 = vpop.f32.mrb[0].mxu0
    %650 = vmatprep.mubr.f32.mxu0 0.0
    %651 = vmatmul.mubr.f32.gmra.mrb[0].mxu0 %v573
    %v652 = vpop.f32.mrb[0].mxu0
    %v653 = vadd.f32 %v556, %v652
    %v654 = vpop.f32.mrb[0].mxu0
    %655 = vmatprep.mubr.f32.mxu0 0.0
    %656 = vmatmul.mubr.f32.gmra.mrb[0].mxu0 %v576
    %v657 = vpop.f32.mrb[0].mxu0
    %v658 = vadd.f32 %v561, %v657
    %v659 = vpop.f32.mrb[0].mxu0
    %660 = vmatprep.mubr.f32.mxu0 0.0
    %661 = vmatmul.mubr.f32.gmra.mrb[0].mxu0 %v579
    %v662 = vpop.f32.mrb[0].mxu0
    %v663 = vadd.f32 %v566, %v662
    %v664 = vpop.f32.mrb[0].mxu0
    %665 = vdwg.mxu0
    %v667 = vsel %vm272, %v454, 0
    %v670 = vsel %vm272, %v459, 0
    %v673 = vsel %vm272, %v464, 0
    %v676 = vsel %vm272, %v469, 0
    %678 = vmatprep.subr.mxu0 0.0
    %679 = vmatpush1.msra.mxu0 %v262
    %680 = vmatprep.subr.mxu0 0.0
    %681 = vmatpush1.msra.mxu0 %v263
    %682 = vmatprep.subr.mxu0 0.0
    %683 = vmatpush1.msra.mxu0 %v264
    %684 = vmatprep.subr.mxu0 0.0
    %685 = vmatpush1.msra.mxu0 %v265
    %686 = vmatprep.subr.mxu0 0.0
    %687 = vmatpush1.msra.mxu0 0.0
    %688 = vmatprep.subr.mxu0 0.0
    %689 = vmatpush1.msra.mxu0 0.0
    %690 = vmatprep.subr.mxu0 0.0
    %691 = vmatpush1.msra.mxu0 0.0
    %692 = vmatprep.subr.mxu0 0.0
    %693 = vmatpush1.msra.mxu0 0.0
    %694 = vmatprep.subr.mxu0 0.0
    %695 = vmatpush1.msra.mxu0 0.0
    %696 = vmatprep.subr.mxu0 0.0
    %697 = vmatpush1.msra.mxu0 0.0
    %698 = vmatprep.subr.mxu0 0.0
    %699 = vmatpush1.msra.mxu0 0.0
    %700 = vmatprep.subr.mxu0 0.0
    %701 = vmatpush1.msra.mxu0 0.0
    %702 = vmatprep.subr.mxu0 0.0
    %703 = vmatpush1.msra.mxu0 0.0
    %704 = vmatprep.subr.mxu0 0.0
    %705 = vmatpush1.msra.mxu0 0.0
    %706 = vmatprep.subr.mxu0 0.0
    %707 = vmatpush1.msra.mxu0 0.0
    %708 = vmatprep.subr.mxu0 0.0
    %709 = vmatpush1.msra.mxu0 0.0
    %710 = vmatprep.subr.mxu0 0.0
    %711 = vmatpush1.msra.mxu0 0.0
    %712 = vmatprep.subr.mxu0 0.0
    %713 = vmatpush1.msra.mxu0 0.0
    %714 = vmatprep.subr.mxu0 0.0
    %715 = vmatpush1.msra.mxu0 0.0
    %716 = vmatprep.subr.mxu0 0.0
    %717 = vmatpush1.msra.mxu0 0.0
    %718 = vmatprep.subr.mxu0 0.0
    %719 = vmatpush1.msra.mxu0 0.0
    %720 = vmatprep.subr.mxu0 0.0
    %721 = vmatpush1.msra.mxu0 0.0
    %722 = vmatprep.subr.mxu0 0.0
    %723 = vmatpush1.msra.mxu0 0.0
    %724 = vmatprep.subr.mxu0 0.0
    %725 = vmatpush1.msra.mxu0 0.0
    %726 = vmatprep.subr.mxu0 0.0
    %727 = vmatpush1.msra.mxu0 0.0
    %728 = vmatprep.subr.mxu0 0.0
    %729 = vmatpush1.msra.mxu0 0.0
    %730 = vmatprep.subr.mxu0 0.0
    %731 = vmatpush1.msra.mxu0 0.0
    %732 = vmatprep.subr.mxu0 0.0
    %733 = vmatpush1.msra.mxu0 0.0
    %734 = vmatprep.subr.mxu0 0.0
    %735 = vmatpush1.msra.mxu0 0.0
    %736 = vmatprep.subr.mxu0 0.0
    %737 = vmatpush1.msra.mxu0 0.0
    %738 = vmatprep.subr.mxu0 0.0
    %739 = vmatpush1.msra.mxu0 0.0
    %740 = vmatprep.subr.mxu0 0.0
    %741 = vmatpush1.msra.mxu0 0.0
    %742 = vmatprep.mubr.f32.mxu0 0.0
    %743 = vmatmul.mubr.f32.gmra.mrb[0].mxu0 %v667
    %v744 = vpop.f32.mrb[0].mxu0
    %v745 = vadd.f32 0.0, %v744
    %v746 = vpop.f32.mrb[0].mxu0
    %747 = vmatprep.mubr.f32.mxu0 0.0
    %748 = vmatmul.mubr.f32.gmra.mrb[0].mxu0 %v670
    %v749 = vpop.f32.mrb[0].mxu0
    %v750 = vadd.f32 0.0, %v749
    %v751 = vpop.f32.mrb[0].mxu0
    %752 = vmatprep.mubr.f32.mxu0 0.0
    %753 = vmatmul.mubr.f32.gmra.mrb[0].mxu0 %v673
    %v754 = vpop.f32.mrb[0].mxu0
    %v755 = vadd.f32 0.0, %v754
    %v756 = vpop.f32.mrb[0].mxu0
    %757 = vmatprep.mubr.f32.mxu0 0.0
    %758 = vmatmul.mubr.f32.gmra.mrb[0].mxu0 %v676
    %v759 = vpop.f32.mrb[0].mxu0
    %v760 = vadd.f32 0.0, %v759
    %v761 = vpop.f32.mrb[0].mxu0
    %762 = vdwg.mxu0
    %v763 = vadd.f32 %v648, %v745
    %v764 = vadd.f32 %v653, %v750
    %v765 = vadd.f32 %v658, %v755
    %v766 = vadd.f32 %v663, %v760
    %v768 = vlaneseq
    %v769 = vshrl.u32 %v768, 7
    %v770 = vsub.s32 0, %v769
    %v771 = vrot.slane %v266, %v770
    %v773 = vmul.f32 %v763, %v771
    %v774 = vmul.f32 %v764, %v771
    %v775 = vmul.f32 %v765, %v771
    %v776 = vmul.f32 %v766, %v771
    %v778 = vlaneseq
    %v779 = vshrl.u32 %v778, 7
    %v780 = vsub.s32 0, %v779
    %v781 = vrot.slane %v267, %v780
    %v783 = vadd.f32 %v773, %v781
    %v784 = vadd.f32 %v774, %v781
    %v785 = vadd.f32 %v775, %v781
    %v786 = vadd.f32 %v776, %v781
    %v787 = vmax.f32 %v783, 0.0
    %v788 = vmax.f32 %v784, 0.0
    %v789 = vmax.f32 %v785, 0.0
    %v790 = vmax.f32 %v786, 0.0
    %v791 = vld [vmem:[%s7] sm:$0xff]
    %v792 = vld [vmem:[%s7 + $0x8] sm:$0xff]
    %v794 = vsel %vm272, %v791, 0
    %v797 = vsel %vm272, %v792, 0
    %799 = vmatprep.subr.mxu0 0.0
    %800 = vmatpush1.msra.mxu0 %v787
    %801 = vmatprep.subr.mxu0 0.0
    %802 = vmatpush1.msra.mxu0 %v788
    %803 = vmatprep.subr.mxu0 0.0
    %804 = vmatpush1.msra.mxu0 %v789
    %805 = vmatprep.subr.mxu0 0.0
    %806 = vmatpush1.msra.mxu0 %v790
    %807 = vmatprep.subr.mxu0 0.0
    %808 = vmatpush1.msra.mxu0 0.0
    %809 = vmatprep.subr.mxu0 0.0
    %810 = vmatpush1.msra.mxu0 0.0
    %811 = vmatprep.subr.mxu0 0.0
    %812 = vmatpush1.msra.mxu0 0.0
    %813 = vmatprep.subr.mxu0 0.0
    %814 = vmatpush1.msra.mxu0 0.0
    %815 = vmatprep.subr.mxu0 0.0
    %816 = vmatpush1.msra.mxu0 0.0
    %817 = vmatprep.subr.mxu0 0.0
    %818 = vmatpush1.msra.mxu0 0.0
    %819 = vmatprep.subr.mxu0 0.0
    %820 = vmatpush1.msra.mxu0 0.0
    %821 = vmatprep.subr.mxu0 0.0
    %822 = vmatpush1.msra.mxu0 0.0
    %823 = vmatprep.subr.mxu0 0.0
    %824 = vmatpush1.msra.mxu0 0.0
    %825 = vmatprep.subr.mxu0 0.0
    %826 = vmatpush1.msra.mxu0 0.0
    %827 = vmatprep.subr.mxu0 0.0
    %828 = vmatpush1.msra.mxu0 0.0
    %829 = vmatprep.subr.mxu0 0.0
    %830 = vmatpush1.msra.mxu0 0.0
    %831 = vmatprep.subr.mxu0 0.0
    %832 = vmatpush1.msra.mxu0 0.0
    %833 = vmatprep.subr.mxu0 0.0
    %834 = vmatpush1.msra.mxu0 0.0
    %835 = vmatprep.subr.mxu0 0.0
    %836 = vmatpush1.msra.mxu0 0.0
    %837 = vmatprep.subr.mxu0 0.0
    %838 = vmatpush1.msra.mxu0 0.0
    %839 = vmatprep.subr.mxu0 0.0
    %840 = vmatpush1.msra.mxu0 0.0
    %841 = vmatprep.subr.mxu0 0.0
    %842 = vmatpush1.msra.mxu0 0.0
    %843 = vmatprep.subr.mxu0 0.0
    %844 = vmatpush1.msra.mxu0 0.0
    %845 = vmatprep.subr.mxu0 0.0
    %846 = vmatpush1.msra.mxu0 0.0
    %847 = vmatprep.subr.mxu0 0.0
    %848 = vmatpush1.msra.mxu0 0.0
    %849 = vmatprep.subr.mxu0 0.0
    %850 = vmatpush1.msra.mxu0 0.0
    %851 = vmatprep.subr.mxu0 0.0
    %852 = vmatpush1.msra.mxu0 0.0
    %853 = vmatprep.subr.mxu0 0.0
    %854 = vmatpush1.msra.mxu0 0.0
    %855 = vmatprep.subr.mxu0 0.0
    %856 = vmatpush1.msra.mxu0 0.0
    %857 = vmatprep.subr.mxu0 0.0
    %858 = vmatpush1.msra.mxu0 0.0
    %859 = vmatprep.subr.mxu0 0.0
    %860 = vmatpush1.msra.mxu0 0.0
    %861 = vmatprep.subr.mxu0 0.0
    %862 = vmatpush1.msra.mxu0 0.0
    %863 = vmatprep.mubr.f32.mxu0 0.0
    %864 = vmatmul.mubr.f32.gmra.mrb[0].mxu0 %v794
    %v865 = vpop.f32.mrb[0].mxu0
    %v866 = vadd.f32 0.0, %v865
    %v867 = vpop.f32.mrb[0].mxu0
    %868 = vmatprep.mubr.f32.mxu0 0.0
    %869 = vmatmul.mubr.f32.gmra.mrb[0].mxu0 %v797
    %v870 = vpop.f32.mrb[0].mxu0
    %v871 = vadd.f32 0.0, %v870
    %v872 = vpop.f32.mrb[0].mxu0
    %873 = vdwg.mxu0
    %s874 = scalar_lea.vmem %s7, 16
    %v875 = vld [vmem:[%s874] sm:$0xff]
    %v876 = vld [vmem:[%s874 + $0x8] sm:$0xff]
    %v878 = vsel %vm272, %v875, 0
    %v881 = vsel %vm272, %v876, 0
    %883 = vmatprep.subr.mxu0 0.0
    %884 = vmatpush1.msra.mxu0 %v787
    %885 = vmatprep.subr.mxu0 0.0
    %886 = vmatpush1.msra.mxu0 %v788
    %887 = vmatprep.subr.mxu0 0.0
    %888 = vmatpush1.msra.mxu0 %v789
    %889 = vmatprep.subr.mxu0 0.0
    %890 = vmatpush1.msra.mxu0 %v790
    %891 = vmatprep.subr.mxu0 0.0
    %892 = vmatpush1.msra.mxu0 0.0
    %893 = vmatprep.subr.mxu0 0.0
    %894 = vmatpush1.msra.mxu0 0.0
    %895 = vmatprep.subr.mxu0 0.0
    %896 = vmatpush1.msra.mxu0 0.0
    %897 = vmatprep.subr.mxu0 0.0
    %898 = vmatpush1.msra.mxu0 0.0
    %899 = vmatprep.subr.mxu0 0.0
    %900 = vmatpush1.msra.mxu0 0.0
    %901 = vmatprep.subr.mxu0 0.0
    %902 = vmatpush1.msra.mxu0 0.0
    %903 = vmatprep.subr.mxu0 0.0
    %904 = vmatpush1.msra.mxu0 0.0
    %905 = vmatprep.subr.mxu0 0.0
    %906 = vmatpush1.msra.mxu0 0.0
    %907 = vmatprep.subr.mxu0 0.0
    %908 = vmatpush1.msra.mxu0 0.0
    %909 = vmatprep.subr.mxu0 0.0
    %910 = vmatpush1.msra.mxu0 0.0
    %911 = vmatprep.subr.mxu0 0.0
    %912 = vmatpush1.msra.mxu0 0.0
    %913 = vmatprep.subr.mxu0 0.0
    %914 = vmatpush1.msra.mxu0 0.0
    %915 = vmatprep.subr.mxu0 0.0
    %916 = vmatpush1.msra.mxu0 0.0
    %917 = vmatprep.subr.mxu0 0.0
    %918 = vmatpush1.msra.mxu0 0.0
    %919 = vmatprep.subr.mxu0 0.0
    %920 = vmatpush1.msra.mxu0 0.0
    %921 = vmatprep.subr.mxu0 0.0
    %922 = vmatpush1.msra.mxu0 0.0
    %923 = vmatprep.subr.mxu0 0.0
    %924 = vmatpush1.msra.mxu0 0.0
    %925 = vmatprep.subr.mxu0 0.0
    %926 = vmatpush1.msra.mxu0 0.0
    %927 = vmatprep.subr.mxu0 0.0
    %928 = vmatpush1.msra.mxu0 0.0
    %929 = vmatprep.subr.mxu0 0.0
    %930 = vmatpush1.msra.mxu0 0.0
    %931 = vmatprep.subr.mxu0 0.0
    %932 = vmatpush1.msra.mxu0 0.0
    %933 = vmatprep.subr.mxu0 0.0
    %934 = vmatpush1.msra.mxu0 0.0
    %935 = vmatprep.subr.mxu0 0.0
    %936 = vmatpush1.msra.mxu0 0.0
    %937 = vmatprep.subr.mxu0 0.0
    %938 = vmatpush1.msra.mxu0 0.0
    %939 = vmatprep.subr.mxu0 0.0
    %940 = vmatpush1.msra.mxu0 0.0
    %941 = vmatprep.subr.mxu0 0.0
    %942 = vmatpush1.msra.mxu0 0.0
    %943 = vmatprep.subr.mxu0 0.0
    %944 = vmatpush1.msra.mxu0 0.0
    %945 = vmatprep.subr.mxu0 0.0
    %946 = vmatpush1.msra.mxu0 0.0
    %947 = vmatprep.mubr.f32.mxu0 0.0
    %948 = vmatmul.mubr.f32.gmra.mrb[0].mxu0 %v878
    %v949 = vpop.f32.mrb[0].mxu0
    %v950 = vadd.f32 0.0, %v949
    %v951 = vpop.f32.mrb[0].mxu0
    %952 = vmatprep.mubr.f32.mxu0 0.0
    %953 = vmatmul.mubr.f32.gmra.mrb[0].mxu0 %v881
    %v954 = vpop.f32.mrb[0].mxu0
    %v955 = vadd.f32 0.0, %v954
    %v956 = vpop.f32.mrb[0].mxu0
    %957 = vdwg.mxu0
    %s958 = scalar_lea.vmem %s7, 32
    %v959 = vld [vmem:[%s958] sm:$0xff]
    %v960 = vld [vmem:[%s958 + $0x8] sm:$0xff]
    %v962 = vsel %vm272, %v959, 0
    %v965 = vsel %vm272, %v960, 0
    %967 = vmatprep.subr.mxu0 0.0
    %968 = vmatpush1.msra.mxu0 %v787
    %969 = vmatprep.subr.mxu0 0.0
    %970 = vmatpush1.msra.mxu0 %v788
    %971 = vmatprep.subr.mxu0 0.0
    %972 = vmatpush1.msra.mxu0 %v789
    %973 = vmatprep.subr.mxu0 0.0
    %974 = vmatpush1.msra.mxu0 %v790
    %975 = vmatprep.subr.mxu0 0.0
    %976 = vmatpush1.msra.mxu0 0.0
    %977 = vmatprep.subr.mxu0 0.0
    %978 = vmatpush1.msra.mxu0 0.0
    %979 = vmatprep.subr.mxu0 0.0
    %980 = vmatpush1.msra.mxu0 0.0
    %981 = vmatprep.subr.mxu0 0.0
    %982 = vmatpush1.msra.mxu0 0.0
    %983 = vmatprep.subr.mxu0 0.0
    %984 = vmatpush1.msra.mxu0 0.0
    %985 = vmatprep.subr.mxu0 0.0
    %986 = vmatpush1.msra.mxu0 0.0
    %987 = vmatprep.subr.mxu0 0.0
    %988 = vmatpush1.msra.mxu0 0.0
    %989 = vmatprep.subr.mxu0 0.0
    %990 = vmatpush1.msra.mxu0 0.0
    %991 = vmatprep.subr.mxu0 0.0
    %992 = vmatpush1.msra.mxu0 0.0
    %993 = vmatprep.subr.mxu0 0.0
    %994 = vmatpush1.msra.mxu0 0.0
    %995 = vmatprep.subr.mxu0 0.0
    %996 = vmatpush1.msra.mxu0 0.0
    %997 = vmatprep.subr.mxu0 0.0
    %998 = vmatpush1.msra.mxu0 0.0
    %999 = vmatprep.subr.mxu0 0.0
    %1000 = vmatpush1.msra.mxu0 0.0
    %1001 = vmatprep.subr.mxu0 0.0
    %1002 = vmatpush1.msra.mxu0 0.0
    %1003 = vmatprep.subr.mxu0 0.0
    %1004 = vmatpush1.msra.mxu0 0.0
    %1005 = vmatprep.subr.mxu0 0.0
    %1006 = vmatpush1.msra.mxu0 0.0
    %1007 = vmatprep.subr.mxu0 0.0
    %1008 = vmatpush1.msra.mxu0 0.0
    %1009 = vmatprep.subr.mxu0 0.0
    %1010 = vmatpush1.msra.mxu0 0.0
    %1011 = vmatprep.subr.mxu0 0.0
    %1012 = vmatpush1.msra.mxu0 0.0
    %1013 = vmatprep.subr.mxu0 0.0
    %1014 = vmatpush1.msra.mxu0 0.0
    %1015 = vmatprep.subr.mxu0 0.0
    %1016 = vmatpush1.msra.mxu0 0.0
    %1017 = vmatprep.subr.mxu0 0.0
    %1018 = vmatpush1.msra.mxu0 0.0
    %1019 = vmatprep.subr.mxu0 0.0
    %1020 = vmatpush1.msra.mxu0 0.0
    %1021 = vmatprep.subr.mxu0 0.0
    %1022 = vmatpush1.msra.mxu0 0.0
    %1023 = vmatprep.subr.mxu0 0.0
    %1024 = vmatpush1.msra.mxu0 0.0
    %1025 = vmatprep.subr.mxu0 0.0
    %1026 = vmatpush1.msra.mxu0 0.0
    %1027 = vmatprep.subr.mxu0 0.0
    %1028 = vmatpush1.msra.mxu0 0.0
    %1029 = vmatprep.subr.mxu0 0.0
    %1030 = vmatpush1.msra.mxu0 0.0
    %1031 = vmatprep.mubr.f32.mxu0 0.0
    %1032 = vmatmul.mubr.f32.gmra.mrb[0].mxu0 %v962
    %v1033 = vpop.f32.mrb[0].mxu0
    %v1034 = vadd.f32 0.0, %v1033
    %v1035 = vpop.f32.mrb[0].mxu0
    %1036 = vmatprep.mubr.f32.mxu0 0.0
    %1037 = vmatmul.mubr.f32.gmra.mrb[0].mxu0 %v965
    %v1038 = vpop.f32.mrb[0].mxu0
    %v1039 = vadd.f32 0.0, %v1038
    %v1040 = vpop.f32.mrb[0].mxu0
    %1041 = vdwg.mxu0
    %v1042 = vmax.f32 %v866, %v950
    %v1043 = vmax.f32 %v871, %v955
    %v1044 = vmax.f32 %v1042, %v1034
    %v1045 = vmax.f32 %v1043, %v1039
    %s1046 = scalar_lea.vmem [#allocation5], 96
    %v1047 = vld [vmem:[%s1046] sm:$0xff]
    %v1048 = vld [vmem:[%s1046 + $0x8] sm:$0xff]
    %v1049 = vld [vmem:[%s1046 + $0x10] sm:$0xff]
    %v1050 = vld [vmem:[%s1046 + $0x18] sm:$0xff]
    %s1051 = scalar_lea.vmem [#allocation5], 128
    %v1052 = vld [vmem:[%s1051] sm:$0xff]
    %v1053 = vld [vmem:[%s1051 + $0x8] sm:$0xff]
    %v1054 = vld [vmem:[%s1051 + $0x10] sm:$0xff]
    %v1055 = vld [vmem:[%s1051 + $0x18] sm:$0xff]
    %s1056 = scalar_lea.vmem [#allocation5], 160
    %v1057 = vld [vmem:[%s1056] sm:$0xff]
    %v1058 = vld [vmem:[%s1056 + $0x8] sm:$0xff]
    %v1059 = vld [vmem:[%s1056 + $0x10] sm:$0xff]
    %v1060 = vld [vmem:[%s1056 + $0x18] sm:$0xff]
    %s1061 = scalar_lea.vmem %s4, 1
    %v1062 = vld [vmem:[%s1061] sm:$0x1]
    %s1063 = scalar_lea.vmem [#allocation7], 1
    %v1064 = vld [vmem:[%s1063] sm:$0x1]
    %v1065 = vld [vmem:[#allocation10] sm:$0xff]
    %v1066 = vld [vmem:[#allocation10 + $0x8] sm:$0xff]
    %vm1067 = vcmask 130048
    %v1069 = vsel %vm1067, %v1065, 0
    %v1072 = vsel %vm1067, %v1066, 0
    %1074 = vmatprep.subr.mxu0 0.0
    %1075 = vmatpush1.msra.mxu0 %v1044
    %1076 = vmatprep.subr.mxu0 0.0
    %1077 = vmatpush1.msra.mxu0 %v1045
    %1078 = vmatprep.subr.mxu0 0.0
    %1079 = vmatpush1.msra.mxu0 0.0
    %1080 = vmatprep.subr.mxu0 0.0
    %1081 = vmatpush1.msra.mxu0 0.0
    %1082 = vmatprep.subr.mxu0 0.0
    %1083 = vmatpush1.msra.mxu0 0.0
    %1084 = vmatprep.subr.mxu0 0.0
    %1085 = vmatpush1.msra.mxu0 0.0
    %1086 = vmatprep.subr.mxu0 0.0
    %1087 = vmatpush1.msra.mxu0 0.0
    %1088 = vmatprep.subr.mxu0 0.0
    %1089 = vmatpush1.msra.mxu0 0.0
    %1090 = vmatprep.subr.mxu0 0.0
    %1091 = vmatpush1.msra.mxu0 0.0
    %1092 = vmatprep.subr.mxu0 0.0
    %1093 = vmatpush1.msra.mxu0 0.0
    %1094 = vmatprep.subr.mxu0 0.0
    %1095 = vmatpush1.msra.mxu0 0.0
    %1096 = vmatprep.subr.mxu0 0.0
    %1097 = vmatpush1.msra.mxu0 0.0
    %1098 = vmatprep.subr.mxu0 0.0
    %1099 = vmatpush1.msra.mxu0 0.0
    %1100 = vmatprep.subr.mxu0 0.0
    %1101 = vmatpush1.msra.mxu0 0.0
    %1102 = vmatprep.subr.mxu0 0.0
    %1103 = vmatpush1.msra.mxu0 0.0
    %1104 = vmatprep.subr.mxu0 0.0
    %1105 = vmatpush1.msra.mxu0 0.0
    %1106 = vmatprep.subr.mxu0 0.0
    %1107 = vmatpush1.msra.mxu0 0.0
    %1108 = vmatprep.subr.mxu0 0.0
    %1109 = vmatpush1.msra.mxu0 0.0
    %1110 = vmatprep.subr.mxu0 0.0
    %1111 = vmatpush1.msra.mxu0 0.0
    %1112 = vmatprep.subr.mxu0 0.0
    %1113 = vmatpush1.msra.mxu0 0.0
    %1114 = vmatprep.subr.mxu0 0.0
    %1115 = vmatpush1.msra.mxu0 0.0
    %1116 = vmatprep.subr.mxu0 0.0
    %1117 = vmatpush1.msra.mxu0 0.0
    %1118 = vmatprep.subr.mxu0 0.0
    %1119 = vmatpush1.msra.mxu0 0.0
    %1120 = vmatprep.subr.mxu0 0.0
    %1121 = vmatpush1.msra.mxu0 0.0
    %1122 = vmatprep.subr.mxu0 0.0
    %1123 = vmatpush1.msra.mxu0 0.0
    %1124 = vmatprep.subr.mxu0 0.0
    %1125 = vmatpush1.msra.mxu0 0.0
    %1126 = vmatprep.subr.mxu0 0.0
    %1127 = vmatpush1.msra.mxu0 0.0
    %1128 = vmatprep.subr.mxu0 0.0
    %1129 = vmatpush1.msra.mxu0 0.0
    %1130 = vmatprep.subr.mxu0 0.0
    %1131 = vmatpush1.msra.mxu0 0.0
    %1132 = vmatprep.subr.mxu0 0.0
    %1133 = vmatpush1.msra.mxu0 0.0
    %1134 = vmatprep.subr.mxu0 0.0
    %1135 = vmatpush1.msra.mxu0 0.0
    %1136 = vmatprep.subr.mxu0 0.0
    %1137 = vmatpush1.msra.mxu0 0.0
    %1138 = vmatprep.mubr.f32.mxu0 0.0
    %1139 = vmatmul.mubr.f32.gmra.mrb[0].mxu0 %v1069
    %v1140 = vpop.f32.mrb[0].mxu0
    %v1141 = vadd.f32 0.0, %v1140
    %v1142 = vpop.f32.mrb[0].mxu0
    %1143 = vmatprep.mubr.f32.mxu0 0.0
    %1144 = vmatmul.mubr.f32.gmra.mrb[0].mxu0 %v1072
    %v1145 = vpop.f32.mrb[0].mxu0
    %v1146 = vadd.f32 0.0, %v1145
    %v1147 = vpop.f32.mrb[0].mxu0
    %1148 = vdwg.mxu0
    %s1149 = scalar_lea.vmem [#allocation10], 16
    %v1150 = vld [vmem:[%s1149] sm:$0xff]
    %v1151 = vld [vmem:[%s1149 + $0x8] sm:$0xff]
    %v1153 = vsel %vm1067, %v1150, 0
    %v1156 = vsel %vm1067, %v1151, 0
    %1158 = vmatprep.subr.mxu0 0.0
    %1159 = vmatpush1.msra.mxu0 %v1044
    %1160 = vmatprep.subr.mxu0 0.0
    %1161 = vmatpush1.msra.mxu0 %v1045
    %1162 = vmatprep.subr.mxu0 0.0
    %1163 = vmatpush1.msra.mxu0 0.0
    %1164 = vmatprep.subr.mxu0 0.0
    %1165 = vmatpush1.msra.mxu0 0.0
    %1166 = vmatprep.subr.mxu0 0.0
    %1167 = vmatpush1.msra.mxu0 0.0
    %1168 = vmatprep.subr.mxu0 0.0
    %1169 = vmatpush1.msra.mxu0 0.0
    %1170 = vmatprep.subr.mxu0 0.0
    %1171 = vmatpush1.msra.mxu0 0.0
    %1172 = vmatprep.subr.mxu0 0.0
    %1173 = vmatpush1.msra.mxu0 0.0
    %1174 = vmatprep.subr.mxu0 0.0
    %1175 = vmatpush1.msra.mxu0 0.0
    %1176 = vmatprep.subr.mxu0 0.0
    %1177 = vmatpush1.msra.mxu0 0.0
    %1178 = vmatprep.subr.mxu0 0.0
    %1179 = vmatpush1.msra.mxu0 0.0
    %1180 = vmatprep.subr.mxu0 0.0
    %1181 = vmatpush1.msra.mxu0 0.0
    %1182 = vmatprep.subr.mxu0 0.0
    %1183 = vmatpush1.msra.mxu0 0.0
    %1184 = vmatprep.subr.mxu0 0.0
    %1185 = vmatpush1.msra.mxu0 0.0
    %1186 = vmatprep.subr.mxu0 0.0
    %1187 = vmatpush1.msra.mxu0 0.0
    %1188 = vmatprep.subr.mxu0 0.0
    %1189 = vmatpush1.msra.mxu0 0.0
    %1190 = vmatprep.subr.mxu0 0.0
    %1191 = vmatpush1.msra.mxu0 0.0
    %1192 = vmatprep.subr.mxu0 0.0
    %1193 = vmatpush1.msra.mxu0 0.0
    %1194 = vmatprep.subr.mxu0 0.0
    %1195 = vmatpush1.msra.mxu0 0.0
    %1196 = vmatprep.subr.mxu0 0.0
    %1197 = vmatpush1.msra.mxu0 0.0
    %1198 = vmatprep.subr.mxu0 0.0
    %1199 = vmatpush1.msra.mxu0 0.0
    %1200 = vmatprep.subr.mxu0 0.0
    %1201 = vmatpush1.msra.mxu0 0.0
    %1202 = vmatprep.subr.mxu0 0.0
    %1203 = vmatpush1.msra.mxu0 0.0
    %1204 = vmatprep.subr.mxu0 0.0
    %1205 = vmatpush1.msra.mxu0 0.0
    %1206 = vmatprep.subr.mxu0 0.0
    %1207 = vmatpush1.msra.mxu0 0.0
    %1208 = vmatprep.subr.mxu0 0.0
    %1209 = vmatpush1.msra.mxu0 0.0
    %1210 = vmatprep.subr.mxu0 0.0
    %1211 = vmatpush1.msra.mxu0 0.0
    %1212 = vmatprep.subr.mxu0 0.0
    %1213 = vmatpush1.msra.mxu0 0.0
    %1214 = vmatprep.subr.mxu0 0.0
    %1215 = vmatpush1.msra.mxu0 0.0
    %1216 = vmatprep.subr.mxu0 0.0
    %1217 = vmatpush1.msra.mxu0 0.0
    %1218 = vmatprep.subr.mxu0 0.0
    %1219 = vmatpush1.msra.mxu0 0.0
    %1220 = vmatprep.subr.mxu0 0.0
    %1221 = vmatpush1.msra.mxu0 0.0
    %1222 = vmatprep.mubr.f32.mxu0 0.0
    %1223 = vmatmul.mubr.f32.gmra.mrb[0].mxu0 %v1153
    %v1224 = vpop.f32.mrb[0].mxu0
    %v1225 = vadd.f32 0.0, %v1224
    %v1226 = vpop.f32.mrb[0].mxu0
    %1227 = vmatprep.mubr.f32.mxu0 0.0
    %1228 = vmatmul.mubr.f32.gmra.mrb[0].mxu0 %v1156
    %v1229 = vpop.f32.mrb[0].mxu0
    %v1230 = vadd.f32 0.0, %v1229
    %v1231 = vpop.f32.mrb[0].mxu0
    %1232 = vdwg.mxu0
    %v1234 = vsel %vm272, %v1044, 0
    %v1237 = vsel %vm272, %v1045, 0
    %1239 = vmatprep.subr.mxu0 0.0
    %1240 = vmatpush1.msra.mxu0 %v1052
    %1241 = vmatprep.subr.mxu0 0.0
    %1242 = vmatpush1.msra.mxu0 %v1053
    %1243 = vmatprep.subr.mxu0 0.0
    %1244 = vmatpush1.msra.mxu0 %v1054
    %1245 = vmatprep.subr.mxu0 0.0
    %1246 = vmatpush1.msra.mxu0 %v1055
    %1247 = vmatprep.subr.mxu0 0.0
    %1248 = vmatpush1.msra.mxu0 0.0
    %1249 = vmatprep.subr.mxu0 0.0
    %1250 = vmatpush1.msra.mxu0 0.0
    %1251 = vmatprep.subr.mxu0 0.0
    %1252 = vmatpush1.msra.mxu0 0.0
    %1253 = vmatprep.subr.mxu0 0.0
    %1254 = vmatpush1.msra.mxu0 0.0
    %1255 = vmatprep.subr.mxu0 0.0
    %1256 = vmatpush1.msra.mxu0 0.0
    %1257 = vmatprep.subr.mxu0 0.0
    %1258 = vmatpush1.msra.mxu0 0.0
    %1259 = vmatprep.subr.mxu0 0.0
    %1260 = vmatpush1.msra.mxu0 0.0
    %1261 = vmatprep.subr.mxu0 0.0
    %1262 = vmatpush1.msra.mxu0 0.0
    %1263 = vmatprep.subr.mxu0 0.0
    %1264 = vmatpush1.msra.mxu0 0.0
    %1265 = vmatprep.subr.mxu0 0.0
    %1266 = vmatpush1.msra.mxu0 0.0
    %1267 = vmatprep.subr.mxu0 0.0
    %1268 = vmatpush1.msra.mxu0 0.0
    %1269 = vmatprep.subr.mxu0 0.0
    %1270 = vmatpush1.msra.mxu0 0.0
    %1271 = vmatprep.subr.mxu0 0.0
    %1272 = vmatpush1.msra.mxu0 0.0
    %1273 = vmatprep.subr.mxu0 0.0
    %1274 = vmatpush1.msra.mxu0 0.0
    %1275 = vmatprep.subr.mxu0 0.0
    %1276 = vmatpush1.msra.mxu0 0.0
    %1277 = vmatprep.subr.mxu0 0.0
    %1278 = vmatpush1.msra.mxu0 0.0
    %1279 = vmatprep.subr.mxu0 0.0
    %1280 = vmatpush1.msra.mxu0 0.0
    %1281 = vmatprep.subr.mxu0 0.0
    %1282 = vmatpush1.msra.mxu0 0.0
    %1283 = vmatprep.subr.mxu0 0.0
    %1284 = vmatpush1.msra.mxu0 0.0
    %1285 = vmatprep.subr.mxu0 0.0
    %1286 = vmatpush1.msra.mxu0 0.0
    %1287 = vmatprep.subr.mxu0 0.0
    %1288 = vmatpush1.msra.mxu0 0.0
    %1289 = vmatprep.subr.mxu0 0.0
    %1290 = vmatpush1.msra.mxu0 0.0
    %1291 = vmatprep.subr.mxu0 0.0
    %1292 = vmatpush1.msra.mxu0 0.0
    %1293 = vmatprep.subr.mxu0 0.0
    %1294 = vmatpush1.msra.mxu0 0.0
    %1295 = vmatprep.subr.mxu0 0.0
    %1296 = vmatpush1.msra.mxu0 0.0
    %1297 = vmatprep.subr.mxu0 0.0
    %1298 = vmatpush1.msra.mxu0 0.0
    %1299 = vmatprep.subr.mxu0 0.0
    %1300 = vmatpush1.msra.mxu0 0.0
    %1301 = vmatprep.subr.mxu0 0.0
    %1302 = vmatpush1.msra.mxu0 0.0
    %1303 = vmatprep.mubr.f32.mxu0 0.0
    %1304 = vmatmul.mubr.f32.gmra.mrb[0].mxu0 %v1234
    %v1305 = vpop.f32.mrb[0].mxu0
    %v1306 = vadd.f32 0.0, %v1305
    %v1307 = vpop.f32.mrb[0].mxu0
    %1308 = vmatprep.mubr.f32.mxu0 0.0
    %1309 = vmatmul.mubr.f32.gmra.mrb[0].mxu0 %v1237
    %v1310 = vpop.f32.mrb[0].mxu0
    %v1311 = vadd.f32 0.0, %v1310
    %v1312 = vpop.f32.mrb[0].mxu0
    %1313 = vdwg.mxu0
    %v1315 = vsel %vm272, %v1141, 0
    %v1318 = vsel %vm272, %v1146, 0
    %1320 = vmatprep.subr.mxu0 0.0
    %1321 = vmatpush1.msra.mxu0 %v1047
    %1322 = vmatprep.subr.mxu0 0.0
    %1323 = vmatpush1.msra.mxu0 %v1048
    %1324 = vmatprep.subr.mxu0 0.0
    %1325 = vmatpush1.msra.mxu0 %v1049
    %1326 = vmatprep.subr.mxu0 0.0
    %1327 = vmatpush1.msra.mxu0 %v1050
    %1328 = vmatprep.subr.mxu0 0.0
    %1329 = vmatpush1.msra.mxu0 0.0
    %1330 = vmatprep.subr.mxu0 0.0
    %1331 = vmatpush1.msra.mxu0 0.0
    %1332 = vmatprep.subr.mxu0 0.0
    %1333 = vmatpush1.msra.mxu0 0.0
    %1334 = vmatprep.subr.mxu0 0.0
    %1335 = vmatpush1.msra.mxu0 0.0
    %1336 = vmatprep.subr.mxu0 0.0
    %1337 = vmatpush1.msra.mxu0 0.0
    %1338 = vmatprep.subr.mxu0 0.0
    %1339 = vmatpush1.msra.mxu0 0.0
    %1340 = vmatprep.subr.mxu0 0.0
    %1341 = vmatpush1.msra.mxu0 0.0
    %1342 = vmatprep.subr.mxu0 0.0
    %1343 = vmatpush1.msra.mxu0 0.0
    %1344 = vmatprep.subr.mxu0 0.0
    %1345 = vmatpush1.msra.mxu0 0.0
    %1346 = vmatprep.subr.mxu0 0.0
    %1347 = vmatpush1.msra.mxu0 0.0
    %1348 = vmatprep.subr.mxu0 0.0
    %1349 = vmatpush1.msra.mxu0 0.0
    %1350 = vmatprep.subr.mxu0 0.0
    %1351 = vmatpush1.msra.mxu0 0.0
    %1352 = vmatprep.subr.mxu0 0.0
    %1353 = vmatpush1.msra.mxu0 0.0
    %1354 = vmatprep.subr.mxu0 0.0
    %1355 = vmatpush1.msra.mxu0 0.0
    %1356 = vmatprep.subr.mxu0 0.0
    %1357 = vmatpush1.msra.mxu0 0.0
    %1358 = vmatprep.subr.mxu0 0.0
    %1359 = vmatpush1.msra.mxu0 0.0
    %1360 = vmatprep.subr.mxu0 0.0
    %1361 = vmatpush1.msra.mxu0 0.0
    %1362 = vmatprep.subr.mxu0 0.0
    %1363 = vmatpush1.msra.mxu0 0.0
    %1364 = vmatprep.subr.mxu0 0.0
    %1365 = vmatpush1.msra.mxu0 0.0
    %1366 = vmatprep.subr.mxu0 0.0
    %1367 = vmatpush1.msra.mxu0 0.0
    %1368 = vmatprep.subr.mxu0 0.0
    %1369 = vmatpush1.msra.mxu0 0.0
    %1370 = vmatprep.subr.mxu0 0.0
    %1371 = vmatpush1.msra.mxu0 0.0
    %1372 = vmatprep.subr.mxu0 0.0
    %1373 = vmatpush1.msra.mxu0 0.0
    %1374 = vmatprep.subr.mxu0 0.0
    %1375 = vmatpush1.msra.mxu0 0.0
    %1376 = vmatprep.subr.mxu0 0.0
    %1377 = vmatpush1.msra.mxu0 0.0
    %1378 = vmatprep.subr.mxu0 0.0
    %1379 = vmatpush1.msra.mxu0 0.0
    %1380 = vmatprep.subr.mxu0 0.0
    %1381 = vmatpush1.msra.mxu0 0.0
    %1382 = vmatprep.subr.mxu0 0.0
    %1383 = vmatpush1.msra.mxu0 0.0
    %1384 = vmatprep.mubr.f32.mxu0 0.0
    %1385 = vmatmul.mubr.f32.gmra.mrb[0].mxu0 %v1315
    %v1386 = vpop.f32.mrb[0].mxu0
    %v1387 = vadd.f32 %v1306, %v1386
    %v1388 = vpop.f32.mrb[0].mxu0
    %1389 = vmatprep.mubr.f32.mxu0 0.0
    %1390 = vmatmul.mubr.f32.gmra.mrb[0].mxu0 %v1318
    %v1391 = vpop.f32.mrb[0].mxu0
    %v1392 = vadd.f32 %v1311, %v1391
    %v1393 = vpop.f32.mrb[0].mxu0
    %1394 = vdwg.mxu0
    %v1396 = vsel %vm272, %v1225, 0
    %v1399 = vsel %vm272, %v1230, 0
    %1401 = vmatprep.subr.mxu0 0.0
    %1402 = vmatpush1.msra.mxu0 %v1057
    %1403 = vmatprep.subr.mxu0 0.0
    %1404 = vmatpush1.msra.mxu0 %v1058
    %1405 = vmatprep.subr.mxu0 0.0
    %1406 = vmatpush1.msra.mxu0 %v1059
    %1407 = vmatprep.subr.mxu0 0.0
    %1408 = vmatpush1.msra.mxu0 %v1060
    %1409 = vmatprep.subr.mxu0 0.0
    %1410 = vmatpush1.msra.mxu0 0.0
    %1411 = vmatprep.subr.mxu0 0.0
    %1412 = vmatpush1.msra.mxu0 0.0
    %1413 = vmatprep.subr.mxu0 0.0
    %1414 = vmatpush1.msra.mxu0 0.0
    %1415 = vmatprep.subr.mxu0 0.0
    %1416 = vmatpush1.msra.mxu0 0.0
    %1417 = vmatprep.subr.mxu0 0.0
    %1418 = vmatpush1.msra.mxu0 0.0
    %1419 = vmatprep.subr.mxu0 0.0
    %1420 = vmatpush1.msra.mxu0 0.0
    %1421 = vmatprep.subr.mxu0 0.0
    %1422 = vmatpush1.msra.mxu0 0.0
    %1423 = vmatprep.subr.mxu0 0.0
    %1424 = vmatpush1.msra.mxu0 0.0
    %1425 = vmatprep.subr.mxu0 0.0
    %1426 = vmatpush1.msra.mxu0 0.0
    %1427 = vmatprep.subr.mxu0 0.0
    %1428 = vmatpush1.msra.mxu0 0.0
    %1429 = vmatprep.subr.mxu0 0.0
    %1430 = vmatpush1.msra.mxu0 0.0
    %1431 = vmatprep.subr.mxu0 0.0
    %1432 = vmatpush1.msra.mxu0 0.0
    %1433 = vmatprep.subr.mxu0 0.0
    %1434 = vmatpush1.msra.mxu0 0.0
    %1435 = vmatprep.subr.mxu0 0.0
    %1436 = vmatpush1.msra.mxu0 0.0
    %1437 = vmatprep.subr.mxu0 0.0
    %1438 = vmatpush1.msra.mxu0 0.0
    %1439 = vmatprep.subr.mxu0 0.0
    %1440 = vmatpush1.msra.mxu0 0.0
    %1441 = vmatprep.subr.mxu0 0.0
    %1442 = vmatpush1.msra.mxu0 0.0
    %1443 = vmatprep.subr.mxu0 0.0
    %1444 = vmatpush1.msra.mxu0 0.0
    %1445 = vmatprep.subr.mxu0 0.0
    %1446 = vmatpush1.msra.mxu0 0.0
    %1447 = vmatprep.subr.mxu0 0.0
    %1448 = vmatpush1.msra.mxu0 0.0
    %1449 = vmatprep.subr.mxu0 0.0
    %1450 = vmatpush1.msra.mxu0 0.0
    %1451 = vmatprep.subr.mxu0 0.0
    %1452 = vmatpush1.msra.mxu0 0.0
    %1453 = vmatprep.subr.mxu0 0.0
    %1454 = vmatpush1.msra.mxu0 0.0
    %1455 = vmatprep.subr.mxu0 0.0
    %1456 = vmatpush1.msra.mxu0 0.0
    %1457 = vmatprep.subr.mxu0 0.0
    %1458 = vmatpush1.msra.mxu0 0.0
    %1459 = vmatprep.subr.mxu0 0.0
    %1460 = vmatpush1.msra.mxu0 0.0
    %1461 = vmatprep.subr.mxu0 0.0
    %1462 = vmatpush1.msra.mxu0 0.0
    %1463 = vmatprep.subr.mxu0 0.0
    %1464 = vmatpush1.msra.mxu0 0.0
    %1465 = vmatprep.mubr.f32.mxu0 0.0
    %1466 = vmatmul.mubr.f32.gmra.mrb[0].mxu0 %v1396
    %v1467 = vpop.f32.mrb[0].mxu0
    %v1468 = vadd.f32 0.0, %v1467
    %v1469 = vpop.f32.mrb[0].mxu0
    %1470 = vmatprep.mubr.f32.mxu0 0.0
    %1471 = vmatmul.mubr.f32.gmra.mrb[0].mxu0 %v1399
    %v1472 = vpop.f32.mrb[0].mxu0
    %v1473 = vadd.f32 0.0, %v1472
    %v1474 = vpop.f32.mrb[0].mxu0
    %1475 = vdwg.mxu0
    %v1476 = vadd.f32 %v1387, %v1468
    %v1477 = vadd.f32 %v1392, %v1473
    %v1479 = vlaneseq
    %v1480 = vshrl.u32 %v1479, 7
    %v1481 = vsub.s32 0, %v1480
    %v1482 = vrot.slane %v1062, %v1481
    %v1484 = vmul.f32 %v1476, %v1482
    %v1485 = vmul.f32 %v1477, %v1482
    %v1487 = vlaneseq
    %v1488 = vshrl.u32 %v1487, 7
    %v1489 = vsub.s32 0, %v1488
    %v1490 = vrot.slane %v1064, %v1489
    %v1492 = vadd.f32 %v1484, %v1490
    %v1493 = vadd.f32 %v1485, %v1490
    %v1494 = vmax.f32 %v1492, 0.0
    %v1495 = vmax.f32 %v1493, 0.0
    %v1496 = vld [vmem:[#allocation11] sm:$0xff]
    %v1498 = vsel %vm1067, %v1496, 0
    %1500 = vmatprep.subr.mxu0 0.0
    %1501 = vmatpush1.msra.mxu0 %v1494
    %1502 = vmatprep.subr.mxu0 0.0
    %1503 = vmatpush1.msra.mxu0 %v1495
    %1504 = vmatprep.subr.mxu0 0.0
    %1505 = vmatpush1.msra.mxu0 0.0
    %1506 = vmatprep.subr.mxu0 0.0
    %1507 = vmatpush1.msra.mxu0 0.0
    %1508 = vmatprep.subr.mxu0 0.0
    %1509 = vmatpush1.msra.mxu0 0.0
    %1510 = vmatprep.subr.mxu0 0.0
    %1511 = vmatpush1.msra.mxu0 0.0
    %1512 = vmatprep.subr.mxu0 0.0
    %1513 = vmatpush1.msra.mxu0 0.0
    %1514 = vmatprep.subr.mxu0 0.0
    %1515 = vmatpush1.msra.mxu0 0.0
    %1516 = vmatprep.subr.mxu0 0.0
    %1517 = vmatpush1.msra.mxu0 0.0
    %1518 = vmatprep.subr.mxu0 0.0
    %1519 = vmatpush1.msra.mxu0 0.0
    %1520 = vmatprep.subr.mxu0 0.0
    %1521 = vmatpush1.msra.mxu0 0.0
    %1522 = vmatprep.subr.mxu0 0.0
    %1523 = vmatpush1.msra.mxu0 0.0
    %1524 = vmatprep.subr.mxu0 0.0
    %1525 = vmatpush1.msra.mxu0 0.0
    %1526 = vmatprep.subr.mxu0 0.0
    %1527 = vmatpush1.msra.mxu0 0.0
    %1528 = vmatprep.subr.mxu0 0.0
    %1529 = vmatpush1.msra.mxu0 0.0
    %1530 = vmatprep.subr.mxu0 0.0
    %1531 = vmatpush1.msra.mxu0 0.0
    %1532 = vmatprep.subr.mxu0 0.0
    %1533 = vmatpush1.msra.mxu0 0.0
    %1534 = vmatprep.subr.mxu0 0.0
    %1535 = vmatpush1.msra.mxu0 0.0
    %1536 = vmatprep.subr.mxu0 0.0
    %1537 = vmatpush1.msra.mxu0 0.0
    %1538 = vmatprep.subr.mxu0 0.0
    %1539 = vmatpush1.msra.mxu0 0.0
    %1540 = vmatprep.subr.mxu0 0.0
    %1541 = vmatpush1.msra.mxu0 0.0
    %1542 = vmatprep.subr.mxu0 0.0
    %1543 = vmatpush1.msra.mxu0 0.0
    %1544 = vmatprep.subr.mxu0 0.0
    %1545 = vmatpush1.msra.mxu0 0.0
    %1546 = vmatprep.subr.mxu0 0.0
    %1547 = vmatpush1.msra.mxu0 0.0
    %1548 = vmatprep.subr.mxu0 0.0
    %1549 = vmatpush1.msra.mxu0 0.0
    %1550 = vmatprep.subr.mxu0 0.0
    %1551 = vmatpush1.msra.mxu0 0.0
    %1552 = vmatprep.subr.mxu0 0.0
    %1553 = vmatpush1.msra.mxu0 0.0
    %1554 = vmatprep.subr.mxu0 0.0
    %1555 = vmatpush1.msra.mxu0 0.0
    %1556 = vmatprep.subr.mxu0 0.0
    %1557 = vmatpush1.msra.mxu0 0.0
    %1558 = vmatprep.subr.mxu0 0.0
    %1559 = vmatpush1.msra.mxu0 0.0
    %1560 = vmatprep.subr.mxu0 0.0
    %1561 = vmatpush1.msra.mxu0 0.0
    %1562 = vmatprep.subr.mxu0 0.0
    %1563 = vmatpush1.msra.mxu0 0.0
    %1564 = vmatprep.mubr.f32.mxu0 0.0
    %1565 = vmatmul.mubr.f32.gmra.mrb[0].mxu0 %v1498
    %v1566 = vpop.f32.mrb[0].mxu0
    %v1567 = vadd.f32 0.0, %v1566
    %v1568 = vpop.f32.mrb[0].mxu0
    %1569 = vdwg.mxu0
    %s1570 = scalar_lea.vmem [#allocation11], 8
    %v1571 = vld [vmem:[%s1570] sm:$0xff]
    %v1573 = vsel %vm1067, %v1571, 0
    %1575 = vmatprep.subr.mxu0 0.0
    %1576 = vmatpush1.msra.mxu0 %v1494
    %1577 = vmatprep.subr.mxu0 0.0
    %1578 = vmatpush1.msra.mxu0 %v1495
    %1579 = vmatprep.subr.mxu0 0.0
    %1580 = vmatpush1.msra.mxu0 0.0
    %1581 = vmatprep.subr.mxu0 0.0
    %1582 = vmatpush1.msra.mxu0 0.0
    %1583 = vmatprep.subr.mxu0 0.0
    %1584 = vmatpush1.msra.mxu0 0.0
    %1585 = vmatprep.subr.mxu0 0.0
    %1586 = vmatpush1.msra.mxu0 0.0
    %1587 = vmatprep.subr.mxu0 0.0
    %1588 = vmatpush1.msra.mxu0 0.0
    %1589 = vmatprep.subr.mxu0 0.0
    %1590 = vmatpush1.msra.mxu0 0.0
    %1591 = vmatprep.subr.mxu0 0.0
    %1592 = vmatpush1.msra.mxu0 0.0
    %1593 = vmatprep.subr.mxu0 0.0
    %1594 = vmatpush1.msra.mxu0 0.0
    %1595 = vmatprep.subr.mxu0 0.0
    %1596 = vmatpush1.msra.mxu0 0.0
    %1597 = vmatprep.subr.mxu0 0.0
    %1598 = vmatpush1.msra.mxu0 0.0
    %1599 = vmatprep.subr.mxu0 0.0
    %1600 = vmatpush1.msra.mxu0 0.0
    %1601 = vmatprep.subr.mxu0 0.0
    %1602 = vmatpush1.msra.mxu0 0.0
    %1603 = vmatprep.subr.mxu0 0.0
    %1604 = vmatpush1.msra.mxu0 0.0
    %1605 = vmatprep.subr.mxu0 0.0
    %1606 = vmatpush1.msra.mxu0 0.0
    %1607 = vmatprep.subr.mxu0 0.0
    %1608 = vmatpush1.msra.mxu0 0.0
    %1609 = vmatprep.subr.mxu0 0.0
    %1610 = vmatpush1.msra.mxu0 0.0
    %1611 = vmatprep.subr.mxu0 0.0
    %1612 = vmatpush1.msra.mxu0 0.0
    %1613 = vmatprep.subr.mxu0 0.0
    %1614 = vmatpush1.msra.mxu0 0.0
    %1615 = vmatprep.subr.mxu0 0.0
    %1616 = vmatpush1.msra.mxu0 0.0
    %1617 = vmatprep.subr.mxu0 0.0
    %1618 = vmatpush1.msra.mxu0 0.0
    %1619 = vmatprep.subr.mxu0 0.0
    %1620 = vmatpush1.msra.mxu0 0.0
    %1621 = vmatprep.subr.mxu0 0.0
    %1622 = vmatpush1.msra.mxu0 0.0
    %1623 = vmatprep.subr.mxu0 0.0
    %1624 = vmatpush1.msra.mxu0 0.0
    %1625 = vmatprep.subr.mxu0 0.0
    %1626 = vmatpush1.msra.mxu0 0.0
    %1627 = vmatprep.subr.mxu0 0.0
    %1628 = vmatpush1.msra.mxu0 0.0
    %1629 = vmatprep.subr.mxu0 0.0
    %1630 = vmatpush1.msra.mxu0 0.0
    %1631 = vmatprep.subr.mxu0 0.0
    %1632 = vmatpush1.msra.mxu0 0.0
    %1633 = vmatprep.subr.mxu0 0.0
    %1634 = vmatpush1.msra.mxu0 0.0
    %1635 = vmatprep.subr.mxu0 0.0
    %1636 = vmatpush1.msra.mxu0 0.0
    %1637 = vmatprep.subr.mxu0 0.0
    %1638 = vmatpush1.msra.mxu0 0.0
    %1639 = vmatprep.mubr.f32.mxu0 0.0
    %1640 = vmatmul.mubr.f32.gmra.mrb[0].mxu0 %v1573
    %v1641 = vpop.f32.mrb[0].mxu0
    %v1642 = vadd.f32 0.0, %v1641
    %v1643 = vpop.f32.mrb[0].mxu0
    %1644 = vdwg.mxu0
    %s1645 = scalar_lea.vmem [#allocation11], 16
    %v1646 = vld [vmem:[%s1645] sm:$0xff]
    %v1648 = vsel %vm1067, %v1646, 0
    %1650 = vmatprep.subr.mxu0 0.0
    %1651 = vmatpush1.msra.mxu0 %v1494
    %1652 = vmatprep.subr.mxu0 0.0
    %1653 = vmatpush1.msra.mxu0 %v1495
    %1654 = vmatprep.subr.mxu0 0.0
    %1655 = vmatpush1.msra.mxu0 0.0
    %1656 = vmatprep.subr.mxu0 0.0
    %1657 = vmatpush1.msra.mxu0 0.0
    %1658 = vmatprep.subr.mxu0 0.0
    %1659 = vmatpush1.msra.mxu0 0.0
    %1660 = vmatprep.subr.mxu0 0.0
    %1661 = vmatpush1.msra.mxu0 0.0
    %1662 = vmatprep.subr.mxu0 0.0
    %1663 = vmatpush1.msra.mxu0 0.0
    %1664 = vmatprep.subr.mxu0 0.0
    %1665 = vmatpush1.msra.mxu0 0.0
    %1666 = vmatprep.subr.mxu0 0.0
    %1667 = vmatpush1.msra.mxu0 0.0
    %1668 = vmatprep.subr.mxu0 0.0
    %1669 = vmatpush1.msra.mxu0 0.0
    %1670 = vmatprep.subr.mxu0 0.0
    %1671 = vmatpush1.msra.mxu0 0.0
    %1672 = vmatprep.subr.mxu0 0.0
    %1673 = vmatpush1.msra.mxu0 0.0
    %1674 = vmatprep.subr.mxu0 0.0
    %1675 = vmatpush1.msra.mxu0 0.0
    %1676 = vmatprep.subr.mxu0 0.0
    %1677 = vmatpush1.msra.mxu0 0.0
    %1678 = vmatprep.subr.mxu0 0.0
    %1679 = vmatpush1.msra.mxu0 0.0
    %1680 = vmatprep.subr.mxu0 0.0
    %1681 = vmatpush1.msra.mxu0 0.0
    %1682 = vmatprep.subr.mxu0 0.0
    %1683 = vmatpush1.msra.mxu0 0.0
    %1684 = vmatprep.subr.mxu0 0.0
    %1685 = vmatpush1.msra.mxu0 0.0
    %1686 = vmatprep.subr.mxu0 0.0
    %1687 = vmatpush1.msra.mxu0 0.0
    %1688 = vmatprep.subr.mxu0 0.0
    %1689 = vmatpush1.msra.mxu0 0.0
    %1690 = vmatprep.subr.mxu0 0.0
    %1691 = vmatpush1.msra.mxu0 0.0
    %1692 = vmatprep.subr.mxu0 0.0
    %1693 = vmatpush1.msra.mxu0 0.0
    %1694 = vmatprep.subr.mxu0 0.0
    %1695 = vmatpush1.msra.mxu0 0.0
    %1696 = vmatprep.subr.mxu0 0.0
    %1697 = vmatpush1.msra.mxu0 0.0
    %1698 = vmatprep.subr.mxu0 0.0
    %1699 = vmatpush1.msra.mxu0 0.0
    %1700 = vmatprep.subr.mxu0 0.0
    %1701 = vmatpush1.msra.mxu0 0.0
    %1702 = vmatprep.subr.mxu0 0.0
    %1703 = vmatpush1.msra.mxu0 0.0
    %1704 = vmatprep.subr.mxu0 0.0
    %1705 = vmatpush1.msra.mxu0 0.0
    %1706 = vmatprep.subr.mxu0 0.0
    %1707 = vmatpush1.msra.mxu0 0.0
    %1708 = vmatprep.subr.mxu0 0.0
    %1709 = vmatpush1.msra.mxu0 0.0
    %1710 = vmatprep.subr.mxu0 0.0
    %1711 = vmatpush1.msra.mxu0 0.0
    %1712 = vmatprep.subr.mxu0 0.0
    %1713 = vmatpush1.msra.mxu0 0.0
    %1714 = vmatprep.mubr.f32.mxu0 0.0
    %1715 = vmatmul.mubr.f32.gmra.mrb[0].mxu0 %v1648
    %v1716 = vpop.f32.mrb[0].mxu0
    %v1717 = vadd.f32 0.0, %v1716
    %v1718 = vpop.f32.mrb[0].mxu0
    %1719 = vdwg.mxu0
    %v1720 = vmax.f32 %v1567, %v1642
    %v1721 = vmax.f32 %v1720, %v1717
    %v1722 = vmul.f32 %v1721, 0.70710677
    %v1723 = vand.u32 2147483647, %v1722
    %v1724 = vmul.f32 %v1723, 0.3275911
    %v1725 = vadd.f32 %v1724, 1.0
    %v1726 = vrcp.pop %v1725
    %v1727 = vmul.f32 1.0, %v1726
    %v1728 = vmul.f32 %v1727, 1.0614054
    %v1729 = vadd.f32 %v1728, -1.4531521
    %v1730 = vmul.f32 %v1729, %v1727
    %v1731 = vadd.f32 %v1730, 1.4214138
    %v1732 = vmul.f32 %v1731, %v1727
    %v1733 = vadd.f32 %v1732, -0.28449672
    %v1734 = vmul.f32 %v1733, %v1727
    %v1735 = vadd.f32 %v1734, 0.2548296
    %v1736 = vmul.f32 %v1735, %v1727
    %v1737 = vsub.f32 0.0, %v1723
    %v1738 = vmul.f32 %v1737, %v1723
    %v1739 = vmul.f32 %v1738, 1.442695
    %v1740 = vpow.pop %v1739
    %v1741 = vmul.f32 %v1736, %v1740
    %v1742 = vsub.f32 1.0, %v1741
    %vm1743 = vcmp.ge.f32.partialorder %v1722, 0.0
    %v1744 = vsub.f32 0.0, %v1742
    %v1745 = vsel %vm1743, %v1742, %v1744
    %v1746 = vmul.f32 %v1721, 0.5
    %v1747 = vadd.f32 %v1745, 1.0
    %v1748 = vmul.f32 %v1746, %v1747
    %v1749 = vld [vmem:[%s10] sm:$0x3]
    %vm1750 = vcmask 64512
    %v1752 = vsel %vm1750, %v1749, 0
    %1754 = vmatprep.subr.mxu0 0.0
    %1755 = vmatpush1.msra.mxu0 %v1748
    %1756 = vmatprep.subr.mxu0 0.0
    %1757 = vmatpush1.msra.mxu0 0.0
    %1758 = vmatprep.subr.mxu0 0.0
    %1759 = vmatpush1.msra.mxu0 0.0
    %1760 = vmatprep.subr.mxu0 0.0
    %1761 = vmatpush1.msra.mxu0 0.0
    %1762 = vmatprep.subr.mxu0 0.0
    %1763 = vmatpush1.msra.mxu0 0.0
    %1764 = vmatprep.subr.mxu0 0.0
    %1765 = vmatpush1.msra.mxu0 0.0
    %1766 = vmatprep.subr.mxu0 0.0
    %1767 = vmatpush1.msra.mxu0 0.0
    %1768 = vmatprep.subr.mxu0 0.0
    %1769 = vmatpush1.msra.mxu0 0.0
    %1770 = vmatprep.subr.mxu0 0.0
    %1771 = vmatpush1.msra.mxu0 0.0
    %1772 = vmatprep.subr.mxu0 0.0
    %1773 = vmatpush1.msra.mxu0 0.0
    %1774 = vmatprep.subr.mxu0 0.0
    %1775 = vmatpush1.msra.mxu0 0.0
    %1776 = vmatprep.subr.mxu0 0.0
    %1777 = vmatpush1.msra.mxu0 0.0
    %1778 = vmatprep.subr.mxu0 0.0
    %1779 = vmatpush1.msra.mxu0 0.0
    %1780 = vmatprep.subr.mxu0 0.0
    %1781 = vmatpush1.msra.mxu0 0.0
    %1782 = vmatprep.subr.mxu0 0.0
    %1783 = vmatpush1.msra.mxu0 0.0
    %1784 = vmatprep.subr.mxu0 0.0
    %1785 = vmatpush1.msra.mxu0 0.0
    %1786 = vmatprep.subr.mxu0 0.0
    %1787 = vmatpush1.msra.mxu0 0.0
    %1788 = vmatprep.subr.mxu0 0.0
    %1789 = vmatpush1.msra.mxu0 0.0
    %1790 = vmatprep.subr.mxu0 0.0
    %1791 = vmatpush1.msra.mxu0 0.0
    %1792 = vmatprep.subr.mxu0 0.0
    %1793 = vmatpush1.msra.mxu0 0.0
    %1794 = vmatprep.subr.mxu0 0.0
    %1795 = vmatpush1.msra.mxu0 0.0
    %1796 = vmatprep.subr.mxu0 0.0
    %1797 = vmatpush1.msra.mxu0 0.0
    %1798 = vmatprep.subr.mxu0 0.0
    %1799 = vmatpush1.msra.mxu0 0.0
    %1800 = vmatprep.subr.mxu0 0.0
    %1801 = vmatpush1.msra.mxu0 0.0
    %1802 = vmatprep.subr.mxu0 0.0
    %1803 = vmatpush1.msra.mxu0 0.0
    %1804 = vmatprep.subr.mxu0 0.0
    %1805 = vmatpush1.msra.mxu0 0.0
    %1806 = vmatprep.subr.mxu0 0.0
    %1807 = vmatpush1.msra.mxu0 0.0
    %1808 = vmatprep.subr.mxu0 0.0
    %1809 = vmatpush1.msra.mxu0 0.0
    %1810 = vmatprep.subr.mxu0 0.0
    %1811 = vmatpush1.msra.mxu0 0.0
    %1812 = vmatprep.subr.mxu0 0.0
    %1813 = vmatpush1.msra.mxu0 0.0
    %1814 = vmatprep.subr.mxu0 0.0
    %1815 = vmatpush1.msra.mxu0 0.0
    %1816 = vmatprep.subr.mxu0 0.0
    %1817 = vmatpush1.msra.mxu0 0.0
    %1818 = vmatprep.mubr.f32.mxu0 0.0
    %1819 = vmatmul.mubr.f32.gmra.mrb[0].mxu0 %v1752
    %v1820 = vpop.f32.mrb[0].mxu0
    %v1821 = vadd.f32 0.0, %v1820
    %v1822 = vpop.f32.mrb[0].mxu0
    %1823 = vdwg.mxu0
    %v1824 = vld [vmem:[#allocation13] sm:$0xff]
    %v1825 = vld [vmem:[#allocation13 + $0x8] sm:$0xff]
    %v1826 = vld [vmem:[#allocation13 + $0x10] sm:$0xff]
    %v1827 = vld [vmem:[#allocation13 + $0x18] sm:$0xff]
    %s1828 = scalar_lea.vmem %s10, 2
    %v1829 = vld [vmem:[%s1828] sm:$0x3]
    %v1831 = vsel %vm1750, %v1829, 0
    %1833 = vmatprep.subr.mxu0 0.0
    %1834 = vmatpush1.msra.mxu0 %v1748
    %1835 = vmatprep.subr.mxu0 0.0
    %1836 = vmatpush1.msra.mxu0 0.0
    %1837 = vmatprep.subr.mxu0 0.0
    %1838 = vmatpush1.msra.mxu0 0.0
    %1839 = vmatprep.subr.mxu0 0.0
    %1840 = vmatpush1.msra.mxu0 0.0
    %1841 = vmatprep.subr.mxu0 0.0
    %1842 = vmatpush1.msra.mxu0 0.0
    %1843 = vmatprep.subr.mxu0 0.0
    %1844 = vmatpush1.msra.mxu0 0.0
    %1845 = vmatprep.subr.mxu0 0.0
    %1846 = vmatpush1.msra.mxu0 0.0
    %1847 = vmatprep.subr.mxu0 0.0
    %1848 = vmatpush1.msra.mxu0 0.0
    %1849 = vmatprep.subr.mxu0 0.0
    %1850 = vmatpush1.msra.mxu0 0.0
    %1851 = vmatprep.subr.mxu0 0.0
    %1852 = vmatpush1.msra.mxu0 0.0
    %1853 = vmatprep.subr.mxu0 0.0
    %1854 = vmatpush1.msra.mxu0 0.0
    %1855 = vmatprep.subr.mxu0 0.0
    %1856 = vmatpush1.msra.mxu0 0.0
    %1857 = vmatprep.subr.mxu0 0.0
    %1858 = vmatpush1.msra.mxu0 0.0
    %1859 = vmatprep.subr.mxu0 0.0
    %1860 = vmatpush1.msra.mxu0 0.0
    %1861 = vmatprep.subr.mxu0 0.0
    %1862 = vmatpush1.msra.mxu0 0.0
    %1863 = vmatprep.subr.mxu0 0.0
    %1864 = vmatpush1.msra.mxu0 0.0
    %1865 = vmatprep.subr.mxu0 0.0
    %1866 = vmatpush1.msra.mxu0 0.0
    %1867 = vmatprep.subr.mxu0 0.0
    %1868 = vmatpush1.msra.mxu0 0.0
    %1869 = vmatprep.subr.mxu0 0.0
    %1870 = vmatpush1.msra.mxu0 0.0
    %1871 = vmatprep.subr.mxu0 0.0
    %1872 = vmatpush1.msra.mxu0 0.0
    %1873 = vmatprep.subr.mxu0 0.0
    %1874 = vmatpush1.msra.mxu0 0.0
    %1875 = vmatprep.subr.mxu0 0.0
    %1876 = vmatpush1.msra.mxu0 0.0
    %1877 = vmatprep.subr.mxu0 0.0
    %1878 = vmatpush1.msra.mxu0 0.0
    %1879 = vmatprep.subr.mxu0 0.0
    %1880 = vmatpush1.msra.mxu0 0.0
    %1881 = vmatprep.subr.mxu0 0.0
    %1882 = vmatpush1.msra.mxu0 0.0
    %1883 = vmatprep.subr.mxu0 0.0
    %1884 = vmatpush1.msra.mxu0 0.0
    %1885 = vmatprep.subr.mxu0 0.0
    %1886 = vmatpush1.msra.mxu0 0.0
    %1887 = vmatprep.subr.mxu0 0.0
    %1888 = vmatpush1.msra.mxu0 0.0
    %1889 = vmatprep.subr.mxu0 0.0
    %1890 = vmatpush1.msra.mxu0 0.0
    %1891 = vmatprep.subr.mxu0 0.0
    %1892 = vmatpush1.msra.mxu0 0.0
    %1893 = vmatprep.subr.mxu0 0.0
    %1894 = vmatpush1.msra.mxu0 0.0
    %1895 = vmatprep.subr.mxu0 0.0
    %1896 = vmatpush1.msra.mxu0 0.0
    %1897 = vmatprep.mubr.f32.mxu0 0.0
    %1898 = vmatmul.mubr.f32.gmra.mrb[0].mxu0 %v1831
    %v1899 = vpop.f32.mrb[0].mxu0
    %v1900 = vadd.f32 0.0, %v1899
    %v1901 = vpop.f32.mrb[0].mxu0
    %1902 = vdwg.mxu0
    %s1903 = scalar_lea.vmem [#allocation13], 32
    %v1904 = vld [vmem:[%s1903] sm:$0xff]
    %v1905 = vld [vmem:[%s1903 + $0x8] sm:$0xff]
    %v1906 = vld [vmem:[%s1903 + $0x10] sm:$0xff]
    %v1907 = vld [vmem:[%s1903 + $0x18] sm:$0xff]
    %v1909 = vsel %vm272, %v1900, 0
    %1911 = vmatprep.subr.mxu0 0.0
    %1912 = vmatpush1.msra.mxu0 %v1904
    %1913 = vmatprep.subr.mxu0 0.0
    %1914 = vmatpush1.msra.mxu0 %v1905
    %1915 = vmatprep.subr.mxu0 0.0
    %1916 = vmatpush1.msra.mxu0 %v1906
    %1917 = vmatprep.subr.mxu0 0.0
    %1918 = vmatpush1.msra.mxu0 %v1907
    %1919 = vmatprep.subr.mxu0 0.0
    %1920 = vmatpush1.msra.mxu0 0.0
    %1921 = vmatprep.subr.mxu0 0.0
    %1922 = vmatpush1.msra.mxu0 0.0
    %1923 = vmatprep.subr.mxu0 0.0
    %1924 = vmatpush1.msra.mxu0 0.0
    %1925 = vmatprep.subr.mxu0 0.0
    %1926 = vmatpush1.msra.mxu0 0.0
    %1927 = vmatprep.subr.mxu0 0.0
    %1928 = vmatpush1.msra.mxu0 0.0
    %1929 = vmatprep.subr.mxu0 0.0
    %1930 = vmatpush1.msra.mxu0 0.0
    %1931 = vmatprep.subr.mxu0 0.0
    %1932 = vmatpush1.msra.mxu0 0.0
    %1933 = vmatprep.subr.mxu0 0.0
    %1934 = vmatpush1.msra.mxu0 0.0
    %1935 = vmatprep.subr.mxu0 0.0
    %1936 = vmatpush1.msra.mxu0 0.0
    %1937 = vmatprep.subr.mxu0 0.0
    %1938 = vmatpush1.msra.mxu0 0.0
    %1939 = vmatprep.subr.mxu0 0.0
    %1940 = vmatpush1.msra.mxu0 0.0
    %1941 = vmatprep.subr.mxu0 0.0
    %1942 = vmatpush1.msra.mxu0 0.0
    %1943 = vmatprep.subr.mxu0 0.0
    %1944 = vmatpush1.msra.mxu0 0.0
    %1945 = vmatprep.subr.mxu0 0.0
    %1946 = vmatpush1.msra.mxu0 0.0
    %1947 = vmatprep.subr.mxu0 0.0
    %1948 = vmatpush1.msra.mxu0 0.0
    %1949 = vmatprep.subr.mxu0 0.0
    %1950 = vmatpush1.msra.mxu0 0.0
    %1951 = vmatprep.subr.mxu0 0.0
    %1952 = vmatpush1.msra.mxu0 0.0
    %1953 = vmatprep.subr.mxu0 0.0
    %1954 = vmatpush1.msra.mxu0 0.0
    %1955 = vmatprep.subr.mxu0 0.0
    %1956 = vmatpush1.msra.mxu0 0.0
    %1957 = vmatprep.subr.mxu0 0.0
    %1958 = vmatpush1.msra.mxu0 0.0
    %1959 = vmatprep.subr.mxu0 0.0
    %1960 = vmatpush1.msra.mxu0 0.0
    %1961 = vmatprep.subr.mxu0 0.0
    %1962 = vmatpush1.msra.mxu0 0.0
    %1963 = vmatprep.subr.mxu0 0.0
    %1964 = vmatpush1.msra.mxu0 0.0
    %1965 = vmatprep.subr.mxu0 0.0
    %1966 = vmatpush1.msra.mxu0 0.0
    %1967 = vmatprep.subr.mxu0 0.0
    %1968 = vmatpush1.msra.mxu0 0.0
    %1969 = vmatprep.subr.mxu0 0.0
    %1970 = vmatpush1.msra.mxu0 0.0
    %1971 = vmatprep.subr.mxu0 0.0
    %1972 = vmatpush1.msra.mxu0 0.0
    %1973 = vmatprep.subr.mxu0 0.0
    %1974 = vmatpush1.msra.mxu0 0.0
    %1975 = vmatprep.mubr.f32.mxu0 0.0
    %1976 = vmatmul.mubr.f32.gmra.mrb[0].mxu0 %v1909
    %v1977 = vpop.f32.mrb[0].mxu0
    %v1978 = vadd.f32 0.0, %v1977
    %v1979 = vpop.f32.mrb[0].mxu0
    %1980 = vdwg.mxu0
    %v1982 = vsel %vm272, %v1821, 0
    %1984 = vmatprep.subr.mxu0 0.0
    %1985 = vmatpush1.msra.mxu0 %v1824
    %1986 = vmatprep.subr.mxu0 0.0
    %1987 = vmatpush1.msra.mxu0 %v1825
    %1988 = vmatprep.subr.mxu0 0.0
    %1989 = vmatpush1.msra.mxu0 %v1826
    %1990 = vmatprep.subr.mxu0 0.0
    %1991 = vmatpush1.msra.mxu0 %v1827
    %1992 = vmatprep.subr.mxu0 0.0
    %1993 = vmatpush1.msra.mxu0 0.0
    %1994 = vmatprep.subr.mxu0 0.0
    %1995 = vmatpush1.msra.mxu0 0.0
    %1996 = vmatprep.subr.mxu0 0.0
    %1997 = vmatpush1.msra.mxu0 0.0
    %1998 = vmatprep.subr.mxu0 0.0
    %1999 = vmatpush1.msra.mxu0 0.0
    %2000 = vmatprep.subr.mxu0 0.0
    %2001 = vmatpush1.msra.mxu0 0.0
    %2002 = vmatprep.subr.mxu0 0.0
    %2003 = vmatpush1.msra.mxu0 0.0
    %2004 = vmatprep.subr.mxu0 0.0
    %2005 = vmatpush1.msra.mxu0 0.0
    %2006 = vmatprep.subr.mxu0 0.0
    %2007 = vmatpush1.msra.mxu0 0.0
    %2008 = vmatprep.subr.mxu0 0.0
    %2009 = vmatpush1.msra.mxu0 0.0
    %2010 = vmatprep.subr.mxu0 0.0
    %2011 = vmatpush1.msra.mxu0 0.0
    %2012 = vmatprep.subr.mxu0 0.0
    %2013 = vmatpush1.msra.mxu0 0.0
    %2014 = vmatprep.subr.mxu0 0.0
    %2015 = vmatpush1.msra.mxu0 0.0
    %2016 = vmatprep.subr.mxu0 0.0
    %2017 = vmatpush1.msra.mxu0 0.0
    %2018 = vmatprep.subr.mxu0 0.0
    %2019 = vmatpush1.msra.mxu0 0.0
    %2020 = vmatprep.subr.mxu0 0.0
    %2021 = vmatpush1.msra.mxu0 0.0
    %2022 = vmatprep.subr.mxu0 0.0
    %2023 = vmatpush1.msra.mxu0 0.0
    %2024 = vmatprep.subr.mxu0 0.0
    %2025 = vmatpush1.msra.mxu0 0.0
    %2026 = vmatprep.subr.mxu0 0.0
    %2027 = vmatpush1.msra.mxu0 0.0
    %2028 = vmatprep.subr.mxu0 0.0
    %2029 = vmatpush1.msra.mxu0 0.0
    %2030 = vmatprep.subr.mxu0 0.0
    %2031 = vmatpush1.msra.mxu0 0.0
    %2032 = vmatprep.subr.mxu0 0.0
    %2033 = vmatpush1.msra.mxu0 0.0
    %2034 = vmatprep.subr.mxu0 0.0
    %2035 = vmatpush1.msra.mxu0 0.0
    %2036 = vmatprep.subr.mxu0 0.0
    %2037 = vmatpush1.msra.mxu0 0.0
    %2038 = vmatprep.subr.mxu0 0.0
    %2039 = vmatpush1.msra.mxu0 0.0
    %2040 = vmatprep.subr.mxu0 0.0
    %2041 = vmatpush1.msra.mxu0 0.0
    %2042 = vmatprep.subr.mxu0 0.0
    %2043 = vmatpush1.msra.mxu0 0.0
    %2044 = vmatprep.subr.mxu0 0.0
    %2045 = vmatpush1.msra.mxu0 0.0
    %2046 = vmatprep.subr.mxu0 0.0
    %2047 = vmatpush1.msra.mxu0 0.0
    %2048 = vmatprep.mubr.f32.mxu0 0.0
    %2049 = vmatmul.mubr.f32.gmra.mrb[0].mxu0 %v1982
    %v2050 = vpop.f32.mrb[0].mxu0
    %v2051 = vadd.f32 %v1978, %v2050
    %v2052 = vpop.f32.mrb[0].mxu0
    %2053 = vdwg.mxu0
    %s2054 = scalar_lea.vmem %s10, 4
    %v2055 = vld [vmem:[%s2054] sm:$0x3]
    %v2057 = vsel %vm1750, %v2055, 0
    %2059 = vmatprep.subr.mxu0 0.0
    %2060 = vmatpush1.msra.mxu0 %v1748
    %2061 = vmatprep.subr.mxu0 0.0
    %2062 = vmatpush1.msra.mxu0 0.0
    %2063 = vmatprep.subr.mxu0 0.0
    %2064 = vmatpush1.msra.mxu0 0.0
    %2065 = vmatprep.subr.mxu0 0.0
    %2066 = vmatpush1.msra.mxu0 0.0
    %2067 = vmatprep.subr.mxu0 0.0
    %2068 = vmatpush1.msra.mxu0 0.0
    %2069 = vmatprep.subr.mxu0 0.0
    %2070 = vmatpush1.msra.mxu0 0.0
    %2071 = vmatprep.subr.mxu0 0.0
    %2072 = vmatpush1.msra.mxu0 0.0
    %2073 = vmatprep.subr.mxu0 0.0
    %2074 = vmatpush1.msra.mxu0 0.0
    %2075 = vmatprep.subr.mxu0 0.0
    %2076 = vmatpush1.msra.mxu0 0.0
    %2077 = vmatprep.subr.mxu0 0.0
    %2078 = vmatpush1.msra.mxu0 0.0
    %2079 = vmatprep.subr.mxu0 0.0
    %2080 = vmatpush1.msra.mxu0 0.0
    %2081 = vmatprep.subr.mxu0 0.0
    %2082 = vmatpush1.msra.mxu0 0.0
    %2083 = vmatprep.subr.mxu0 0.0
    %2084 = vmatpush1.msra.mxu0 0.0
    %2085 = vmatprep.subr.mxu0 0.0
    %2086 = vmatpush1.msra.mxu0 0.0
    %2087 = vmatprep.subr.mxu0 0.0
    %2088 = vmatpush1.msra.mxu0 0.0
    %2089 = vmatprep.subr.mxu0 0.0
    %2090 = vmatpush1.msra.mxu0 0.0
    %2091 = vmatprep.subr.mxu0 0.0
    %2092 = vmatpush1.msra.mxu0 0.0
    %2093 = vmatprep.subr.mxu0 0.0
    %2094 = vmatpush1.msra.mxu0 0.0
    %2095 = vmatprep.subr.mxu0 0.0
    %2096 = vmatpush1.msra.mxu0 0.0
    %2097 = vmatprep.subr.mxu0 0.0
    %2098 = vmatpush1.msra.mxu0 0.0
    %2099 = vmatprep.subr.mxu0 0.0
    %2100 = vmatpush1.msra.mxu0 0.0
    %2101 = vmatprep.subr.mxu0 0.0
    %2102 = vmatpush1.msra.mxu0 0.0
    %2103 = vmatprep.subr.mxu0 0.0
    %2104 = vmatpush1.msra.mxu0 0.0
    %2105 = vmatprep.subr.mxu0 0.0
    %2106 = vmatpush1.msra.mxu0 0.0
    %2107 = vmatprep.subr.mxu0 0.0
    %2108 = vmatpush1.msra.mxu0 0.0
    %2109 = vmatprep.subr.mxu0 0.0
    %2110 = vmatpush1.msra.mxu0 0.0
    %2111 = vmatprep.subr.mxu0 0.0
    %2112 = vmatpush1.msra.mxu0 0.0
    %2113 = vmatprep.subr.mxu0 0.0
    %2114 = vmatpush1.msra.mxu0 0.0
    %2115 = vmatprep.subr.mxu0 0.0
    %2116 = vmatpush1.msra.mxu0 0.0
    %2117 = vmatprep.subr.mxu0 0.0
    %2118 = vmatpush1.msra.mxu0 0.0
    %2119 = vmatprep.subr.mxu0 0.0
    %2120 = vmatpush1.msra.mxu0 0.0
    %2121 = vmatprep.subr.mxu0 0.0
    %2122 = vmatpush1.msra.mxu0 0.0
    %2123 = vmatprep.mubr.f32.mxu0 0.0
    %2124 = vmatmul.mubr.f32.gmra.mrb[0].mxu0 %v2057
    %v2125 = vpop.f32.mrb[0].mxu0
    %v2126 = vadd.f32 0.0, %v2125
    %v2127 = vpop.f32.mrb[0].mxu0
    %2128 = vdwg.mxu0
    %s2129 = scalar_lea.vmem [#allocation13], 64
    %v2130 = vld [vmem:[%s2129] sm:$0xff]
    %v2131 = vld [vmem:[%s2129 + $0x8] sm:$0xff]
    %v2132 = vld [vmem:[%s2129 + $0x10] sm:$0xff]
    %v2133 = vld [vmem:[%s2129 + $0x18] sm:$0xff]
    %v2135 = vsel %vm272, %v2126, 0
    %2137 = vmatprep.subr.mxu0 0.0
    %2138 = vmatpush1.msra.mxu0 %v2130
    %2139 = vmatprep.subr.mxu0 0.0
    %2140 = vmatpush1.msra.mxu0 %v2131
    %2141 = vmatprep.subr.mxu0 0.0
    %2142 = vmatpush1.msra.mxu0 %v2132
    %2143 = vmatprep.subr.mxu0 0.0
    %2144 = vmatpush1.msra.mxu0 %v2133
    %2145 = vmatprep.subr.mxu0 0.0
    %2146 = vmatpush1.msra.mxu0 0.0
    %2147 = vmatprep.subr.mxu0 0.0
    %2148 = vmatpush1.msra.mxu0 0.0
    %2149 = vmatprep.subr.mxu0 0.0
    %2150 = vmatpush1.msra.mxu0 0.0
    %2151 = vmatprep.subr.mxu0 0.0
    %2152 = vmatpush1.msra.mxu0 0.0
    %2153 = vmatprep.subr.mxu0 0.0
    %2154 = vmatpush1.msra.mxu0 0.0
    %2155 = vmatprep.subr.mxu0 0.0
    %2156 = vmatpush1.msra.mxu0 0.0
    %2157 = vmatprep.subr.mxu0 0.0
    %2158 = vmatpush1.msra.mxu0 0.0
    %2159 = vmatprep.subr.mxu0 0.0
    %2160 = vmatpush1.msra.mxu0 0.0
    %2161 = vmatprep.subr.mxu0 0.0
    %2162 = vmatpush1.msra.mxu0 0.0
    %2163 = vmatprep.subr.mxu0 0.0
    %2164 = vmatpush1.msra.mxu0 0.0
    %2165 = vmatprep.subr.mxu0 0.0
    %2166 = vmatpush1.msra.mxu0 0.0
    %2167 = vmatprep.subr.mxu0 0.0
    %2168 = vmatpush1.msra.mxu0 0.0
    %2169 = vmatprep.subr.mxu0 0.0
    %2170 = vmatpush1.msra.mxu0 0.0
    %2171 = vmatprep.subr.mxu0 0.0
    %2172 = vmatpush1.msra.mxu0 0.0
    %2173 = vmatprep.subr.mxu0 0.0
    %2174 = vmatpush1.msra.mxu0 0.0
    %2175 = vmatprep.subr.mxu0 0.0
    %2176 = vmatpush1.msra.mxu0 0.0
    %2177 = vmatprep.subr.mxu0 0.0
    %2178 = vmatpush1.msra.mxu0 0.0
    %2179 = vmatprep.subr.mxu0 0.0
    %2180 = vmatpush1.msra.mxu0 0.0
    %2181 = vmatprep.subr.mxu0 0.0
    %2182 = vmatpush1.msra.mxu0 0.0
    %2183 = vmatprep.subr.mxu0 0.0
    %2184 = vmatpush1.msra.mxu0 0.0
    %2185 = vmatprep.subr.mxu0 0.0
    %2186 = vmatpush1.msra.mxu0 0.0
    %2187 = vmatprep.subr.mxu0 0.0
    %2188 = vmatpush1.msra.mxu0 0.0
    %2189 = vmatprep.subr.mxu0 0.0
    %2190 = vmatpush1.msra.mxu0 0.0
    %2191 = vmatprep.subr.mxu0 0.0
    %2192 = vmatpush1.msra.mxu0 0.0
    %2193 = vmatprep.subr.mxu0 0.0
    %2194 = vmatpush1.msra.mxu0 0.0
    %2195 = vmatprep.subr.mxu0 0.0
    %2196 = vmatpush1.msra.mxu0 0.0
    %2197 = vmatprep.subr.mxu0 0.0
    %2198 = vmatpush1.msra.mxu0 0.0
    %2199 = vmatprep.subr.mxu0 0.0
    %2200 = vmatpush1.msra.mxu0 0.0
    %2201 = vmatprep.mubr.f32.mxu0 0.0
    %2202 = vmatmul.mubr.f32.gmra.mrb[0].mxu0 %v2135
    %v2203 = vpop.f32.mrb[0].mxu0
    %v2204 = vadd.f32 0.0, %v2203
    %v2205 = vpop.f32.mrb[0].mxu0
    %2206 = vdwg.mxu0
    %v2207 = vadd.f32 %v2051, %v2204
    %s2208 = scalar_lea.vmem %s10, 6
    %v2209 = vld [vmem:[%s2208] sm:$0x3]
    %v2211 = vsel %vm1750, %v2209, 0
    %2213 = vmatprep.subr.mxu0 0.0
    %2214 = vmatpush1.msra.mxu0 %v1748
    %2215 = vmatprep.subr.mxu0 0.0
    %2216 = vmatpush1.msra.mxu0 0.0
    %2217 = vmatprep.subr.mxu0 0.0
    %2218 = vmatpush1.msra.mxu0 0.0
    %2219 = vmatprep.subr.mxu0 0.0
    %2220 = vmatpush1.msra.mxu0 0.0
    %2221 = vmatprep.subr.mxu0 0.0
    %2222 = vmatpush1.msra.mxu0 0.0
    %2223 = vmatprep.subr.mxu0 0.0
    %2224 = vmatpush1.msra.mxu0 0.0
    %2225 = vmatprep.subr.mxu0 0.0
    %2226 = vmatpush1.msra.mxu0 0.0
    %2227 = vmatprep.subr.mxu0 0.0
    %2228 = vmatpush1.msra.mxu0 0.0
    %2229 = vmatprep.subr.mxu0 0.0
    %2230 = vmatpush1.msra.mxu0 0.0
    %2231 = vmatprep.subr.mxu0 0.0
    %2232 = vmatpush1.msra.mxu0 0.0
    %2233 = vmatprep.subr.mxu0 0.0
    %2234 = vmatpush1.msra.mxu0 0.0
    %2235 = vmatprep.subr.mxu0 0.0
    %2236 = vmatpush1.msra.mxu0 0.0
    %2237 = vmatprep.subr.mxu0 0.0
    %2238 = vmatpush1.msra.mxu0 0.0
    %2239 = vmatprep.subr.mxu0 0.0
    %2240 = vmatpush1.msra.mxu0 0.0
    %2241 = vmatprep.subr.mxu0 0.0
    %2242 = vmatpush1.msra.mxu0 0.0
    %2243 = vmatprep.subr.mxu0 0.0
    %2244 = vmatpush1.msra.mxu0 0.0
    %2245 = vmatprep.subr.mxu0 0.0
    %2246 = vmatpush1.msra.mxu0 0.0
    %2247 = vmatprep.subr.mxu0 0.0
    %2248 = vmatpush1.msra.mxu0 0.0
    %2249 = vmatprep.subr.mxu0 0.0
    %2250 = vmatpush1.msra.mxu0 0.0
    %2251 = vmatprep.subr.mxu0 0.0
    %2252 = vmatpush1.msra.mxu0 0.0
    %2253 = vmatprep.subr.mxu0 0.0
    %2254 = vmatpush1.msra.mxu0 0.0
    %2255 = vmatprep.subr.mxu0 0.0
    %2256 = vmatpush1.msra.mxu0 0.0
    %2257 = vmatprep.subr.mxu0 0.0
    %2258 = vmatpush1.msra.mxu0 0.0
    %2259 = vmatprep.subr.mxu0 0.0
    %2260 = vmatpush1.msra.mxu0 0.0
    %2261 = vmatprep.subr.mxu0 0.0
    %2262 = vmatpush1.msra.mxu0 0.0
    %2263 = vmatprep.subr.mxu0 0.0
    %2264 = vmatpush1.msra.mxu0 0.0
    %2265 = vmatprep.subr.mxu0 0.0
    %2266 = vmatpush1.msra.mxu0 0.0
    %2267 = vmatprep.subr.mxu0 0.0
    %2268 = vmatpush1.msra.mxu0 0.0
    %2269 = vmatprep.subr.mxu0 0.0
    %2270 = vmatpush1.msra.mxu0 0.0
    %2271 = vmatprep.subr.mxu0 0.0
    %2272 = vmatpush1.msra.mxu0 0.0
    %2273 = vmatprep.subr.mxu0 0.0
    %2274 = vmatpush1.msra.mxu0 0.0
    %2275 = vmatprep.subr.mxu0 0.0
    %2276 = vmatpush1.msra.mxu0 0.0
    %2277 = vmatprep.mubr.f32.mxu0 0.0
    %2278 = vmatmul.mubr.f32.gmra.mrb[0].mxu0 %v2211
    %v2279 = vpop.f32.mrb[0].mxu0
    %v2280 = vadd.f32 0.0, %v2279
    %v2281 = vpop.f32.mrb[0].mxu0
    %2282 = vdwg.mxu0
    %s2283 = scalar_lea.vmem [#allocation13], 96
    %v2284 = vld [vmem:[%s2283] sm:$0xff]
    %v2285 = vld [vmem:[%s2283 + $0x8] sm:$0xff]
    %v2286 = vld [vmem:[%s2283 + $0x10] sm:$0xff]
    %v2287 = vld [vmem:[%s2283 + $0x18] sm:$0xff]
    %v2289 = vsel %vm272, %v2280, 0
    %2291 = vmatprep.subr.mxu0 0.0
    %2292 = vmatpush1.msra.mxu0 %v2284
    %2293 = vmatprep.subr.mxu0 0.0
    %2294 = vmatpush1.msra.mxu0 %v2285
    %2295 = vmatprep.subr.mxu0 0.0
    %2296 = vmatpush1.msra.mxu0 %v2286
    %2297 = vmatprep.subr.mxu0 0.0
    %2298 = vmatpush1.msra.mxu0 %v2287
    %2299 = vmatprep.subr.mxu0 0.0
    %2300 = vmatpush1.msra.mxu0 0.0
    %2301 = vmatprep.subr.mxu0 0.0
    %2302 = vmatpush1.msra.mxu0 0.0
    %2303 = vmatprep.subr.mxu0 0.0
    %2304 = vmatpush1.msra.mxu0 0.0
    %2305 = vmatprep.subr.mxu0 0.0
    %2306 = vmatpush1.msra.mxu0 0.0
    %2307 = vmatprep.subr.mxu0 0.0
    %2308 = vmatpush1.msra.mxu0 0.0
    %2309 = vmatprep.subr.mxu0 0.0
    %2310 = vmatpush1.msra.mxu0 0.0
    %2311 = vmatprep.subr.mxu0 0.0
    %2312 = vmatpush1.msra.mxu0 0.0
    %2313 = vmatprep.subr.mxu0 0.0
    %2314 = vmatpush1.msra.mxu0 0.0
    %2315 = vmatprep.subr.mxu0 0.0
    %2316 = vmatpush1.msra.mxu0 0.0
    %2317 = vmatprep.subr.mxu0 0.0
    %2318 = vmatpush1.msra.mxu0 0.0
    %2319 = vmatprep.subr.mxu0 0.0
    %2320 = vmatpush1.msra.mxu0 0.0
    %2321 = vmatprep.subr.mxu0 0.0
    %2322 = vmatpush1.msra.mxu0 0.0
    %2323 = vmatprep.subr.mxu0 0.0
    %2324 = vmatpush1.msra.mxu0 0.0
    %2325 = vmatprep.subr.mxu0 0.0
    %2326 = vmatpush1.msra.mxu0 0.0
    %2327 = vmatprep.subr.mxu0 0.0
    %2328 = vmatpush1.msra.mxu0 0.0
    %2329 = vmatprep.subr.mxu0 0.0
    %2330 = vmatpush1.msra.mxu0 0.0
    %2331 = vmatprep.subr.mxu0 0.0
    %2332 = vmatpush1.msra.mxu0 0.0
    %2333 = vmatprep.subr.mxu0 0.0
    %2334 = vmatpush1.msra.mxu0 0.0
    %2335 = vmatprep.subr.mxu0 0.0
    %2336 = vmatpush1.msra.mxu0 0.0
    %2337 = vmatprep.subr.mxu0 0.0
    %2338 = vmatpush1.msra.mxu0 0.0
    %2339 = vmatprep.subr.mxu0 0.0
    %2340 = vmatpush1.msra.mxu0 0.0
    %2341 = vmatprep.subr.mxu0 0.0
    %2342 = vmatpush1.msra.mxu0 0.0
    %2343 = vmatprep.subr.mxu0 0.0
    %2344 = vmatpush1.msra.mxu0 0.0
    %2345 = vmatprep.subr.mxu0 0.0
    %2346 = vmatpush1.msra.mxu0 0.0
    %2347 = vmatprep.subr.mxu0 0.0
    %2348 = vmatpush1.msra.mxu0 0.0
    %2349 = vmatprep.subr.mxu0 0.0
    %2350 = vmatpush1.msra.mxu0 0.0
    %2351 = vmatprep.subr.mxu0 0.0
    %2352 = vmatpush1.msra.mxu0 0.0
    %2353 = vmatprep.subr.mxu0 0.0
    %2354 = vmatpush1.msra.mxu0 0.0
    %2355 = vmatprep.mubr.f32.mxu0 0.0
    %2356 = vmatmul.mubr.f32.gmra.mrb[0].mxu0 %v2289
    %v2357 = vpop.f32.mrb[0].mxu0
    %v2358 = vadd.f32 0.0, %v2357
    %v2359 = vpop.f32.mrb[0].mxu0
    %2360 = vdwg.mxu0
    %v2361 = vadd.f32 %v2207, %v2358
    %v2362 = vld [vmem:[%s12] sm:$0x1]
    %v2364 = vlaneseq
    %v2365 = vshrl.u32 %v2364, 7
    %v2366 = vsub.s32 0, %v2365
    %v2367 = vrot.slane %v2362, %v2366
    %v2369 = vadd.f32 %v2361, %v2367
    %2370 = vst [vmem:[#allocation14] sm:$0x3] %v2369
    // Predicated region
    $region82: #{tpu_custom_call.1} parent=1 // pred_check
      _
    $region83: #{tpu_custom_call.1} parent=1 // pred_check_branch
      %2372 = sbr.rel (0) target = $region85
    $region84: #{tpu_custom_call.1} parent=1 // pred_region
      %s2374 = ssub.s32 32, 32
      %2375 = vsyncadd [#allocation4], %s2374
      %s2377 = sshll.u32 [#allocation14], 4
      %s2378 = int_to_ptr.vmem [resolvable:$true] %s2377
      %2380 = dma.vmem_to_hbm [thread:$0]  %s2378, 32, %s13, [#allocation4]
    $region85: #{tpu_custom_call.1} parent=1 // pred_fallthru
      _
    // Predicated region
    $region86: #{tpu_custom_call.1} parent=1 // pred_check
      _
    $region87: #{tpu_custom_call.1} parent=1 // pred_check_branch
      %2382 = sbr.rel (0) target = $region89
    $region88: #{tpu_custom_call.1} parent=1 // pred_region
      %2383 = dma.done [#allocation4], 32
    $region89: #{tpu_custom_call.1} parent=1 // pred_fallthru
      _
    %2384 = vsyncpa [#allocation3], 1
    %2385 = vsyncpa [#allocation6], 1
    %2386 = vsyncpa [#allocation9], 1
    %2387 = vsyncpa [#allocation12], 1
    %2388 = vsyncpa [#allocation4], 1

</llo_original>
